<compile_context>
chip_gen: v6e
topology: v6e:2x2x1
jax: 0.10.0
libtpu: 0.0.40
codegen_flags: <defaults>
</compile_context>

<pallas_src>
import numpy as np
import jax
import jax.numpy as jnp
from jax.experimental import pallas as pl
from jax.experimental.pallas import tpu as pltpu


# ----------------------------- host-side helpers -----------------------------

def bilinear_matrix(out_size, in_size, align_corners):
    """Interpolation matrix R (out_size, in_size) matching torch bilinear resize."""
    if align_corners:
        if out_size == 1:
            src = np.zeros((out_size,), np.float64)
        else:
            src = np.arange(out_size, dtype=np.float64) * (in_size - 1) / (out_size - 1)
    else:
        scale = in_size / out_size
        src = (np.arange(out_size, dtype=np.float64) + 0.5) * scale - 0.5
        src = np.maximum(src, 0.0)
    i0 = np.clip(np.floor(src).astype(np.int64), 0, in_size - 1)
    i1 = np.minimum(i0 + 1, in_size - 1)
    lam = src - i0
    R = np.zeros((out_size, in_size), np.float32)
    R[np.arange(out_size), i0] += (1.0 - lam).astype(np.float32)
    R[np.arange(out_size), i1] += lam.astype(np.float32)
    return R


def scatter_matrices(H, W, ratio):
    """Scatter matrices for the fused conv output -> interleaved '(w n)' layout.

    The fused conv runs over [y_h | 0-gap | y_w] (length H+1+W).  Qh2[n] maps
    positions 0..H-1 to columns l*ratio+n of the h-branch; Qw2[n] maps
    positions H+1..H+W to columns l*ratio+n of the w-branch; the gap row is 0.
    """
    L2 = H + W + 1
    Qh2 = np.zeros((ratio, L2, H * ratio), np.float32)
    Qw2 = np.zeros((ratio, L2, W * ratio), np.float32)
    for n in range(ratio):
        for l in range(H):
            Qh2[n, l, l * ratio + n] = 1.0
        for l in range(W):
            Qw2[n, H + 1 + l, l * ratio + n] = 1.0
    return Qh2, Qw2


# ------------------------------- Pallas forward --------------------------------

def revolution_naive22_forward(x, params, *, mid, ratio, align_corners,
                               c_blk=None, resize_mode="auto",
                               kron_bytes_limit=16 << 20):
    N, C, H, W = x.shape
    HR, WR = H * ratio, W * ratio
    HW, HRWR = H * W, HR * WR
    L2 = H + W + 1
    Ltot = H + W + HR + WR

    # "kron": resize as one lane-dense matmul (best when the combined operator
    # is small).  "two_stage": two plain 2-D matmuls (for large H*W).
    if resize_mode == "auto":
        resize_mode = "kron" if HW * HRWR * 4 <= kron_bytes_limit else "two_stage"

    if c_blk is None:
        # keep double-buffered per-step blocks small enough for v7x's 64 MiB
        # VMEM (32 MiB default scoped limit) while staying as large as possible.
        c_blk = C
        while c_blk % 16 == 0 and 2 * c_blk * (HRWR + HW) * 4 > (6 << 20):
            c_blk //= 2
    assert C % c_blk == 0 and (c_blk == C or c_blk % 8 == 0), \
        "c_blk must divide C; partial channel tiles must be multiples of 8"

    # ---- host-side precompute: interpolation / pooling / scatter operators ----
    Rh = bilinear_matrix(HR, H, align_corners)                    # (HR, H)
    Rw = bilinear_matrix(WR, W, align_corners)                    # (WR, W)
    rh_cm = Rh.mean(axis=0)                                       # (H,)  column means
    rw_cm = Rw.mean(axis=0)                                       # (W,)

    # One pooling operator applied to x flattened over (H, W):
    #   [mean over W | mean over H | pooled-mean of H-resize | pooled-mean of W-resize]
    M_xh = np.kron(np.eye(H, dtype=np.float32), np.full((W, 1), 1.0 / W, np.float32))
    M_xw = np.kron(np.full((H, 1), 1.0 / H, np.float32), np.eye(W, dtype=np.float32))
    M_oh = np.kron(Rh.T, rw_cm.reshape(W, 1)).astype(np.float32)  # (HW, HR)
    M_ow = np.kron(rh_cm.reshape(H, 1), Rw.T).astype(np.float32)  # (HW, WR)
    Mpool = jnp.asarray(np.concatenate([M_xh, M_xw, M_oh, M_ow], axis=1))  # (HW, Ltot)

    Qh2, Qw2 = scatter_matrices(H, W, ratio)
    Qhw = jnp.asarray(np.concatenate([Qh2, Qw2], axis=2))         # (ratio, L2, HR+WR)

    wc = params["wc_eff"]                                          # (mid, C)  BN folded
    bc = params["bc_eff"][:, None]                                 # (mid, 1)
    we = params["we"]                                              # (mid*ratio, mid, 3)
    be = params["be"]                                              # (mid*ratio,)
    # fold the einops channel-select AND the 3 conv taps into one weight matrix:
    # row n*mid+m <-> original out-channel m*ratio+n ; col block k <-> tap k.
    wconv = jnp.concatenate(
        [jnp.concatenate([we[n::ratio, :, k] for k in range(3)], axis=1)
         for n in range(ratio)], axis=0)                           # (ratio*mid, 3*mid)
    bconv = jnp.concatenate([be[n::ratio] for n in range(ratio)], axis=0)[:, None]
    g = params["gamma"].reshape(())                                # fold gamma into conv_h
    whw = jnp.stack([g * params["wh"], params["ww"]], axis=0)      # (2, C, 2*mid)
    bhw = jnp.stack([g * params["bh"], params["bw"]], axis=0)[:, :, None]  # (2, C, 1)

    x_flat = x.reshape(N, C, HW)                                   # free reshape

    # ---------------- kernel A: pooled / compress / fused conv1d gate branch ----------------
    def kernel_a(x_ref, mpool_ref, wc_ref, bc_ref, wconv_ref, bconv_ref,
                 qhw_ref, whw_ref, bhw_ref, ohc_ref, owc_ref):
        xb = x_ref[0]                                              # (C, HW) f32

        # all four pooled vectors in one matmul, then compress(1x1+BN)+ReLU
        pooled = jnp.dot(xb, mpool_ref[...], preferred_element_type=jnp.float32)  # (C, Ltot)
        y = jnp.maximum(
            jnp.dot(wc_ref[...], pooled, preferred_element_type=jnp.float32)
            + bc_ref[...], 0.0)                                    # (mid, Ltot)
        y_h = y[:, :H]
        y_w = y[:, H:H + W]
        ohm = y[:, H + W:H + W + HR]
        owm = y[:, H + W + HR:]

        # fused Conv1d(k=3, pad=1) over both branches separated by a zero gap:
        # one matmul over [z0; z1; z2], channel-select already folded in wconv.
        zero1 = jnp.zeros((mid, 1), jnp.float32)
        zpad = jnp.concatenate([zero1, y_h, zero1, y_w, zero1], axis=1)   # (mid, H+W+3)
        zcat = jnp.concatenate([zpad[:, 0:L2], zpad[:, 1:1 + L2], zpad[:, 2:2 + L2]],
                               axis=0)                             # (3*mid, L2)
        s_all = jnp.maximum(
            jnp.dot(wconv_ref[...], zcat, preferred_element_type=jnp.float32)
            + bconv_ref[...], 0.0)                                 # (ratio*mid, L2)

        # scatter into the interleaved '(w n)' layout: ratio matmuls, h & w fused
        xhw = jnp.dot(s_all[0:mid], qhw_ref[0], preferred_element_type=jnp.float32)
        for n in range(1, ratio):
            xhw = xhw + jnp.dot(s_all[n * mid:(n + 1) * mid], qhw_ref[n],
                                preferred_element_type=jnp.float32)  # (mid, HR+WR)
        xh_r = xhw[:, :HR]
        xw_r = xhw[:, HR:]

        # conv_h / conv_w: single matmul each over concatenated 2*mid channels
        # (gamma already folded into whw[0]/bhw[0]).
        ohc_ref[0] = (jnp.dot(whw_ref[0], jnp.concatenate([xh_r, ohm], axis=0),
                              preferred_element_type=jnp.float32) + bhw_ref[0])  # (C, HR)
        owc_ref[0] = (jnp.dot(whw_ref[1], jnp.concatenate([xw_r, owm], axis=0),
                              preferred_element_type=jnp.float32) + bhw_ref[1])  # (C, WR)

    full2 = lambda b: (0, 0)
    full3 = lambda b: (0, 0, 0)

    ohc, owc = pl.pallas_call(
        kernel_a,
        out_shape=(jax.ShapeDtypeStruct((N, C, HR), jnp.float32),
                   jax.ShapeDtypeStruct((N, C, WR), jnp.float32)),
        grid=(N,),
        in_specs=[
            pl.BlockSpec((1, C, HW), lambda b: (b, 0, 0)),         # x (flat, f32)
            pl.BlockSpec((HW, Ltot), full2),                       # pooling operator
            pl.BlockSpec((mid, C), full2),                         # wc (BN folded)
            pl.BlockSpec((mid, 1), full2),                         # bc
            pl.BlockSpec((ratio * mid, 3 * mid), full2),           # fused conv weights
            pl.BlockSpec((ratio * mid, 1), full2),                 # fused conv bias
            pl.BlockSpec((ratio, L2, HR + WR), full3),             # scatter [Qh|Qw]
            pl.BlockSpec((2, C, 2 * mid), full3),                  # [gamma*wh, ww]
            pl.BlockSpec((2, C, 1), full3),                        # [gamma*bh, bw]
        ],
        out_specs=[pl.BlockSpec((1, C, HR), lambda b: (b, 0, 0)),
                   pl.BlockSpec((1, C, WR), lambda b: (b, 0, 0))],
        compiler_params=pltpu.CompilerParams(dimension_semantics=("parallel",)),
    )(x_flat, Mpool, wc, bc, wconv, bconv, Qhw, whw, bhw)

    # ---------------- kernel B: resize + gated outer-product + residual + ReLU ----------------
    if resize_mode == "kron":
        # combined resize operator (H*W, HR*WR) and 0/1 gate-expansion operators
        Kmat = jnp.asarray(np.kron(Rh, Rw).T)                      # (HW, HRWR) f32
        Eh = jnp.asarray(np.kron(np.eye(HR, dtype=np.float32),
                                 np.ones((1, WR), np.float32)))    # (HR, HRWR)
        Ew = jnp.asarray(np.kron(np.ones((1, HR), np.float32),
                                 np.eye(WR, dtype=np.float32)))    # (WR, HRWR)

        def kernel_b(x_ref, k_ref, eh_ref, ew_ref, ohc_ref, owc_ref, o_ref):
            # resize: one lane-dense matmul (f32 accumulate), result already flat
            res = jnp.dot(x_ref[0], k_ref[...],
                          preferred_element_type=jnp.float32)      # (c_blk, HRWR)
            # expand per-axis gates to the flat layout on the MXU (no relayouts)
            ohr = jnp.dot(ohc_ref[0], eh_ref[...], preferred_element_type=jnp.float32)
            owt = jnp.dot(owc_ref[0], ew_ref[...], preferred_element_type=jnp.float32)
            # gamma already folded into ohc; lane-dense store
            o_ref[0] = jnp.maximum(ohr * owt + res, 0.0)
            # (output could be emitted as bf16 here if downstream tolerates it)

        out_flat = pl.pallas_call(
            kernel_b,
            out_shape=jax.ShapeDtypeStruct((N, C, HRWR), jnp.float32),
            grid=(N, C // c_blk),
            in_specs=[
                pl.BlockSpec((1, c_blk, HW), lambda b, ci: (b, ci, 0)),   # x (f32)
                pl.BlockSpec((HW, HRWR), lambda b, ci: (0, 0)),           # kron(Rh,Rw)^T
                pl.BlockSpec((HR, HRWR), lambda b, ci: (0, 0)),           # gate-h expand
                pl.BlockSpec((WR, HRWR), lambda b, ci: (0, 0)),           # gate-w expand
                pl.BlockSpec((1, c_blk, HR), lambda b, ci: (b, ci, 0)),   # oh_c (gamma folded)
                pl.BlockSpec((1, c_blk, WR), lambda b, ci: (b, ci, 0)),   # ow_c
            ],
            out_specs=pl.BlockSpec((1, c_blk, HRWR), lambda b, ci: (b, ci, 0)),
            compiler_params=pltpu.CompilerParams(
                dimension_semantics=("parallel", "parallel")),
        )(x_flat, Kmat, Eh, Ew, ohc, owc)
        return out_flat.reshape(N, C, HR, WR)                      # free reshape

    # ---- two_stage fallback (large H*W): two plain 2-D matmuls, no batched dots ----
    RwT_bf = jnp.asarray(Rw.T, jnp.bfloat16)                       # (W, WR)
    # block-diagonal H-resize operator: one matmul for the whole channel tile
    BD = jnp.asarray(np.kron(np.eye(c_blk, dtype=np.float32), Rh), jnp.bfloat16)

    def kernel_b2(x_ref, rwt_ref, bd_ref, ohc_ref, owc_ref, o_ref):
        xb = x_ref[0].astype(jnp.bfloat16).reshape(c_blk * H, W)   # cast in-kernel (x read as f32)
        t = jnp.dot(xb, rwt_ref[...], preferred_element_type=jnp.float32)   # (c_blk*H, WR)
        res = jnp.dot(bd_ref[...], t.astype(jnp.bfloat16),
                      preferred_element_type=jnp.float32)           # (c_blk*HR, WR)
        res = res.reshape(c_blk, HR, WR)
        oh = ohc_ref[0]                                             # (c_blk, HR), gamma folded
        ow = owc_ref[0]                                             # (c_blk, WR)
        o_ref[0] = jnp.maximum(oh[:, :, None] * ow[:, None, :] + res, 0.0)

    out = pl.pallas_call(
        kernel_b2,
        out_shape=jax.ShapeDtypeStruct((N, C, HR, WR), jnp.float32),
        grid=(N, C // c_blk),
        in_specs=[
            pl.BlockSpec((1, c_blk, H, W), lambda b, ci: (b, ci, 0, 0)),   # x (f32)
            pl.BlockSpec((W, WR), lambda b, ci: (0, 0)),                   # Rw^T (bf16)
            pl.BlockSpec((c_blk * HR, c_blk * H), lambda b, ci: (0, 0)),   # blockdiag Rh (bf16)
            pl.BlockSpec((1, c_blk, HR), lambda b, ci: (b, ci, 0)),
            pl.BlockSpec((1, c_blk, WR), lambda b, ci: (b, ci, 0)),
        ],
        out_specs=pl.BlockSpec((1, c_blk, HR, WR), lambda b, ci: (b, ci, 0, 0)),
        compiler_params=pltpu.CompilerParams(
            dimension_semantics=("parallel", "parallel")),
    )(x, RwT_bf, BD, ohc, owc)
    return out


# ---------------------------- pure-JAX reference ------------------------------

def reference_forward(x, params, *, mid, ratio, align_corners):
    N, C, H, W = x.shape
    HR, WR = H * ratio, W * ratio
    Rh = jnp.asarray(bilinear_matrix(HR, H, align_corners))
    RwT = jnp.asarray(bilinear_matrix(WR, W, align_corners).T)
    relu = lambda v: jnp.maximum(v, 0.0)

    wc, bc = params["wc_eff"], params["bc_eff"]
    we, be = params["we"], params["be"]
    wh, bh = params["wh"], params["bh"]
    ww, bw = params["ww"], params["bw"]
    gamma = params["gamma"][0]

    out = jnp.einsum('uh,nchw->ncuw', Rh, x)
    out = jnp.einsum('ncuw,wv->ncuv', out, RwT)                    # (N,C,HR,WR)

    def compress(cat):
        return relu(jnp.einsum('mc,ncl->nml', wc, cat) + bc[None, :, None])

    def conv1d(z):
        L = z.shape[-1]
        zp = jnp.pad(z, ((0, 0), (0, 0), (1, 1)))
        s = sum(jnp.einsum('om,nml->nol', we[:, :, k], zp[:, :, k:k + L])
                for k in range(3))
        return relu(s + be[None, :, None])

    def rearr(z):  # 'b (c n) w -> b c (w n)'
        Nn, _, L = z.shape
        return z.reshape(Nn, mid, ratio, L).transpose(0, 1, 3, 2).reshape(Nn, mid, L * ratio)

    x_h = x.mean(axis=3)
    x_w = x.mean(axis=2)
    y = compress(jnp.concatenate([x_h, x_w], axis=2))
    xh_r = rearr(conv1d(y[:, :, :H]))
    xw_r = rearr(conv1d(y[:, :, H:]))

    o_h = out.mean(axis=3)
    o_w = out.mean(axis=2)
    y2 = compress(jnp.concatenate([o_h, o_w], axis=2))
    ohm, owm = y2[:, :, :HR], y2[:, :, HR:]

    oh_c = jnp.einsum('cm,nml->ncl', wh,
                      jnp.concatenate([xh_r, ohm], axis=1)) + bh[None, :, None]
    ow_c = jnp.einsum('cm,nml->ncl', ww,
                      jnp.concatenate([xw_r, owm], axis=1)) + bw[None, :, None]
    xf = oh_c[:, :, :, None] * ow_c[:, :, None, :]
    return relu(gamma * xf + out)


# ------------------------------------ main -------------------------------------

if __name__ == "__main__":
    N, C, H, W = 2, 16, 16, 16
    mid, ratio = 4, 2
    align_corners = False

    key = jax.random.PRNGKey(0)
    keys = jax.random.split(key, 13)
    x = jax.random.normal(keys[0], (N, C, H, W), jnp.float32)

    # conv_compress = Conv2d(C -> mid, 1x1, bias=False) + BN (eval); fold BN into the conv.
    wcomp = 0.2 * jax.random.normal(keys[1], (mid, C), jnp.float32)
    bn_gamma = 1.0 + 0.1 * jax.random.normal(keys[2], (mid,), jnp.float32)
    bn_beta = 0.05 * jax.random.normal(keys[3], (mid,), jnp.float32)
    bn_mean = 0.1 * jax.random.normal(keys[4], (mid,), jnp.float32)
    bn_var = jnp.abs(jax.random.normal(keys[5], (mid,), jnp.float32)) + 0.5
    bn_scale = bn_gamma / jnp.sqrt(bn_var + 1e-5)

    params = {
        "wc_eff": wcomp * bn_scale[:, None],
        "bc_eff": bn_beta - bn_mean * bn_scale,
        "we": 0.2 * jax.random.normal(keys[6], (mid * ratio, mid, 3), jnp.float32),
        "be": 0.05 * jax.random.normal(keys[7], (mid * ratio,), jnp.float32),
        "wh": 0.2 * jax.random.normal(keys[8], (C, 2 * mid), jnp.float32),
        "bh": 0.05 * jax.random.normal(keys[9], (C,), jnp.float32),
        "ww": 0.2 * jax.random.normal(keys[10], (C, 2 * mid), jnp.float32),
        "bw": 0.05 * jax.random.normal(keys[11], (C,), jnp.float32),
        # module __init__ uses zeros(1); use a nonzero value to exercise the path
        "gamma": jnp.asarray([0.3], jnp.float32),
    }

    ref = reference_forward(x, params, mid=mid, ratio=ratio, align_corners=align_corners)

    # default ("kron") path: f32 end-to-end -> tight tolerance, lane-dense stores
    out = revolution_naive22_forward(x, params, mid=mid, ratio=ratio,
                                     align_corners=align_corners, c_blk=8)
    out = jax.block_until_ready(out)
    assert out.shape == (N, C, H * ratio, W * ratio)
    np.testing.assert_allclose(np.asarray(out), np.asarray(ref), atol=2e-3, rtol=2e-3)

    # fallback ("two_stage") path for large H*W: bf16 resize operands, f32 accum
    out2 = revolution_naive22_forward(x, params, mid=mid, ratio=ratio,
                                      align_corners=align_corners, c_blk=8,
                                      resize_mode="two_stage")
    out2 = jax.block_until_ready(out2)
    np.testing.assert_allclose(np.asarray(out2), np.asarray(ref), atol=3e-2, rtol=2e-3)

    print("KERNEL_OK")
</pallas_src>

<mosaic_0001>
module attributes {stable_mosaic.version = 11 : i64} {
  func.func @kernel_a(%arg0: i32, %arg1: memref<1x16x256xf32, #tpu.memory_space<vmem>>, %arg2: memref<256x96xf32, #tpu.memory_space<vmem>>, %arg3: memref<4x16xf32, #tpu.memory_space<vmem>>, %arg4: memref<4x1xf32, #tpu.memory_space<vmem>>, %arg5: memref<8x12xf32, #tpu.memory_space<vmem>>, %arg6: memref<8x1xf32, #tpu.memory_space<vmem>>, %arg7: memref<2x33x64xf32, #tpu.memory_space<vmem>>, %arg8: memref<2x16x8xf32, #tpu.memory_space<vmem>>, %arg9: memref<2x16x1xf32, #tpu.memory_space<vmem>>, %arg10: memref<1x16x32xf32, #tpu.memory_space<vmem>>, %arg11: memref<1x16x32xf32, #tpu.memory_space<vmem>>) attributes {dimension_semantics = [#tpu.dimension_semantics<parallel>], iteration_bounds = array<i64: 2>, scalar_prefetch = 0 : i64, scratch_operands = 0 : i64, tpu.core_type = #tpu.core_type<tc>, window_params = [{transform_indices = @transform_0, window_bounds = array<i64: 1, 16, 256>}, {pipeline_mode = #tpu.pipeline_mode<synchronous>, transform_indices = @transform_1, window_bounds = array<i64: 256, 96>}, {pipeline_mode = #tpu.pipeline_mode<synchronous>, transform_indices = @transform_2, window_bounds = array<i64: 4, 16>}, {pipeline_mode = #tpu.pipeline_mode<synchronous>, transform_indices = @transform_3, window_bounds = array<i64: 4, 1>}, {pipeline_mode = #tpu.pipeline_mode<synchronous>, transform_indices = @transform_4, window_bounds = array<i64: 8, 12>}, {pipeline_mode = #tpu.pipeline_mode<synchronous>, transform_indices = @transform_5, window_bounds = array<i64: 8, 1>}, {pipeline_mode = #tpu.pipeline_mode<synchronous>, transform_indices = @transform_6, window_bounds = array<i64: 2, 33, 64>}, {pipeline_mode = #tpu.pipeline_mode<synchronous>, transform_indices = @transform_7, window_bounds = array<i64: 2, 16, 8>}, {pipeline_mode = #tpu.pipeline_mode<synchronous>, transform_indices = @transform_8, window_bounds = array<i64: 2, 16, 1>}, {transform_indices = @transform_9, window_bounds = array<i64: 1, 16, 32>}, {transform_indices = @transform_10, window_bounds = array<i64: 1, 16, 32>}]} {
    %c0 = arith.constant 0 : index
    %c0_0 = arith.constant 0 : index
    %c0_1 = arith.constant 0 : index
    %0 = vector.load %arg1[%c0, %c0_0, %c0_1] : memref<1x16x256xf32, #tpu.memory_space<vmem>>, vector<1x16x256xf32>
    %1 = vector.shape_cast %0 : vector<1x16x256xf32> to vector<16x256xf32>
    %c0_2 = arith.constant 0 : index
    %c0_3 = arith.constant 0 : index
    %2 = vector.load %arg2[%c0_2, %c0_3] : memref<256x96xf32, #tpu.memory_space<vmem>>, vector<256x96xf32>
    %cst = arith.constant dense<0.000000e+00> : vector<16x96xf32>
    %3 = tpu.matmul %1, %2, %cst {dimension_numbers = #tpu.dot_dimension_numbers<[1], [0], [0], [1], [0, 0, 1, 1], [], []>} : vector<16x256xf32>, vector<256x96xf32>, vector<16x96xf32> -> vector<16x96xf32>
    %c0_4 = arith.constant 0 : index
    %c0_5 = arith.constant 0 : index
    %4 = vector.load %arg3[%c0_4, %c0_5] : memref<4x16xf32, #tpu.memory_space<vmem>>, vector<4x16xf32>
    %cst_6 = arith.constant dense<0.000000e+00> : vector<4x96xf32>
    %5 = tpu.matmul %4, %3, %cst_6 {dimension_numbers = #tpu.dot_dimension_numbers<[1], [0], [0], [1], [0, 0, 1, 1], [], []>} : vector<4x16xf32>, vector<16x96xf32>, vector<4x96xf32> -> vector<4x96xf32>
    %c0_7 = arith.constant 0 : index
    %c0_8 = arith.constant 0 : index
    %6 = vector.load %arg4[%c0_7, %c0_8] : memref<4x1xf32, #tpu.memory_space<vmem>>, vector<4x1xf32>
    %7 = vector.broadcast %6 : vector<4x1xf32> to vector<4x96xf32>
    %8 = arith.addf %5, %7 : vector<4x96xf32>
    %cst_9 = arith.constant 0.000000e+00 : f32
    %9 = vector.broadcast %cst_9 : f32 to vector<4x96xf32>
    %10 = arith.maximumf %8, %9 : vector<4x96xf32>
    %11 = vector.extract_strided_slice %10 {offsets = [0, 0], sizes = [4, 16], strides = [1, 1]} : vector<4x96xf32> to vector<4x16xf32>
    %12 = vector.extract_strided_slice %10 {offsets = [0, 16], sizes = [4, 16], strides = [1, 1]} : vector<4x96xf32> to vector<4x16xf32>
    %13 = vector.extract_strided_slice %10 {offsets = [0, 32], sizes = [4, 32], strides = [1, 1]} : vector<4x96xf32> to vector<4x32xf32>
    %14 = vector.extract_strided_slice %10 {offsets = [0, 64], sizes = [4, 32], strides = [1, 1]} : vector<4x96xf32> to vector<4x32xf32>
    %cst_10 = arith.constant 0.000000e+00 : f32
    %15 = vector.broadcast %cst_10 : f32 to vector<4x1xf32>
    %16 = tpu.concatenate %15, %11, %15, %12, %15 in 1 : vector<4x1xf32>, vector<4x16xf32>, vector<4x1xf32>, vector<4x16xf32>, vector<4x1xf32> -> vector<4x35xf32>
    %17 = vector.extract_strided_slice %16 {offsets = [0, 0], sizes = [4, 33], strides = [1, 1]} : vector<4x35xf32> to vector<4x33xf32>
    %18 = vector.extract_strided_slice %16 {offsets = [0, 1], sizes = [4, 33], strides = [1, 1]} : vector<4x35xf32> to vector<4x33xf32>
    %19 = vector.extract_strided_slice %16 {offsets = [0, 2], sizes = [4, 33], strides = [1, 1]} : vector<4x35xf32> to vector<4x33xf32>
    %20 = tpu.concatenate %17, %18, %19 in 0 : vector<4x33xf32>, vector<4x33xf32>, vector<4x33xf32> -> vector<12x33xf32>
    %c0_11 = arith.constant 0 : index
    %c0_12 = arith.constant 0 : index
    %21 = vector.load %arg5[%c0_11, %c0_12] : memref<8x12xf32, #tpu.memory_space<vmem>>, vector<8x12xf32>
    %cst_13 = arith.constant dense<0.000000e+00> : vector<8x33xf32>
    %22 = tpu.matmul %21, %20, %cst_13 {dimension_numbers = #tpu.dot_dimension_numbers<[1], [0], [0], [1], [0, 0, 1, 1], [], []>} : vector<8x12xf32>, vector<12x33xf32>, vector<8x33xf32> -> vector<8x33xf32>
    %c0_14 = arith.constant 0 : index
    %c0_15 = arith.constant 0 : index
    %23 = vector.load %arg6[%c0_14, %c0_15] : memref<8x1xf32, #tpu.memory_space<vmem>>, vector<8x1xf32>
    %24 = vector.broadcast %23 : vector<8x1xf32> to vector<8x33xf32>
    %25 = arith.addf %22, %24 : vector<8x33xf32>
    %cst_16 = arith.constant 0.000000e+00 : f32
    %26 = vector.broadcast %cst_16 : f32 to vector<8x33xf32>
    %27 = arith.maximumf %25, %26 : vector<8x33xf32>
    %28 = vector.extract_strided_slice %27 {offsets = [0, 0], sizes = [4, 33], strides = [1, 1]} : vector<8x33xf32> to vector<4x33xf32>
    %c0_17 = arith.constant 0 : index
    %c0_18 = arith.constant 0 : index
    %c0_19 = arith.constant 0 : index
    %29 = vector.load %arg7[%c0_17, %c0_18, %c0_19] : memref<2x33x64xf32, #tpu.memory_space<vmem>>, vector<1x33x64xf32>
    %30 = vector.shape_cast %29 : vector<1x33x64xf32> to vector<33x64xf32>
    %cst_20 = arith.constant dense<0.000000e+00> : vector<4x64xf32>
    %31 = tpu.matmul %28, %30, %cst_20 {dimension_numbers = #tpu.dot_dimension_numbers<[1], [0], [0], [1], [0, 0, 1, 1], [], []>} : vector<4x33xf32>, vector<33x64xf32>, vector<4x64xf32> -> vector<4x64xf32>
    %32 = vector.extract_strided_slice %27 {offsets = [4, 0], sizes = [4, 33], strides = [1, 1]} : vector<8x33xf32> to vector<4x33xf32>
    %c1 = arith.constant 1 : index
    %c0_21 = arith.constant 0 : index
    %c0_22 = arith.constant 0 : index
    %33 = vector.load %arg7[%c1, %c0_21, %c0_22] : memref<2x33x64xf32, #tpu.memory_space<vmem>>, vector<1x33x64xf32>
    %34 = vector.shape_cast %33 : vector<1x33x64xf32> to vector<33x64xf32>
    %cst_23 = arith.constant dense<0.000000e+00> : vector<4x64xf32>
    %35 = tpu.matmul %32, %34, %cst_23 {dimension_numbers = #tpu.dot_dimension_numbers<[1], [0], [0], [1], [0, 0, 1, 1], [], []>} : vector<4x33xf32>, vector<33x64xf32>, vector<4x64xf32> -> vector<4x64xf32>
    %36 = arith.addf %31, %35 : vector<4x64xf32>
    %37 = vector.extract_strided_slice %36 {offsets = [0, 0], sizes = [4, 32], strides = [1, 1]} : vector<4x64xf32> to vector<4x32xf32>
    %38 = vector.extract_strided_slice %36 {offsets = [0, 32], sizes = [4, 32], strides = [1, 1]} : vector<4x64xf32> to vector<4x32xf32>
    %c0_24 = arith.constant 0 : index
    %c0_25 = arith.constant 0 : index
    %c0_26 = arith.constant 0 : index
    %39 = vector.load %arg8[%c0_24, %c0_25, %c0_26] : memref<2x16x8xf32, #tpu.memory_space<vmem>>, vector<1x16x8xf32>
    %40 = vector.shape_cast %39 : vector<1x16x8xf32> to vector<16x8xf32>
    %41 = tpu.concatenate %37, %13 in 0 : vector<4x32xf32>, vector<4x32xf32> -> vector<8x32xf32>
    %cst_27 = arith.constant dense<0.000000e+00> : vector<16x32xf32>
    %42 = tpu.matmul %40, %41, %cst_27 {dimension_numbers = #tpu.dot_dimension_numbers<[1], [0], [0], [1], [0, 0, 1, 1], [], []>} : vector<16x8xf32>, vector<8x32xf32>, vector<16x32xf32> -> vector<16x32xf32>
    %c0_28 = arith.constant 0 : index
    %c0_29 = arith.constant 0 : index
    %c0_30 = arith.constant 0 : index
    %43 = vector.load %arg9[%c0_28, %c0_29, %c0_30] : memref<2x16x1xf32, #tpu.memory_space<vmem>>, vector<1x16x1xf32>
    %44 = vector.shape_cast %43 : vector<1x16x1xf32> to vector<16x1xf32>
    %45 = vector.broadcast %44 : vector<16x1xf32> to vector<16x32xf32>
    %46 = arith.addf %42, %45 : vector<16x32xf32>
    %c0_31 = arith.constant 0 : index
    %c0_32 = arith.constant 0 : index
    %c0_33 = arith.constant 0 : index
    %47 = vector.load %arg10[%c0_31, %c0_32, %c0_33] : memref<1x16x32xf32, #tpu.memory_space<vmem>>, vector<1x16x32xf32>
    %48 = vector.shape_cast %47 : vector<1x16x32xf32> to vector<16x32xf32>
    %49 = vector.shape_cast %46 : vector<16x32xf32> to vector<1x16x32xf32>
    tpu.vector_store %arg10[%c0_31, %c0_32, %c0_33], %49 {strides = array<i32>} : memref<1x16x32xf32, #tpu.memory_space<vmem>>, vector<1x16x32xf32>,
    %c1_34 = arith.constant 1 : index
    %c0_35 = arith.constant 0 : index
    %c0_36 = arith.constant 0 : index
    %50 = vector.load %arg8[%c1_34, %c0_35, %c0_36] : memref<2x16x8xf32, #tpu.memory_space<vmem>>, vector<1x16x8xf32>
    %51 = vector.shape_cast %50 : vector<1x16x8xf32> to vector<16x8xf32>
    %52 = tpu.concatenate %38, %14 in 0 : vector<4x32xf32>, vector<4x32xf32> -> vector<8x32xf32>
    %cst_37 = arith.constant dense<0.000000e+00> : vector<16x32xf32>
    %53 = tpu.matmul %51, %52, %cst_37 {dimension_numbers = #tpu.dot_dimension_numbers<[1], [0], [0], [1], [0, 0, 1, 1], [], []>} : vector<16x8xf32>, vector<8x32xf32>, vector<16x32xf32> -> vector<16x32xf32>
    %c1_38 = arith.constant 1 : index
    %c0_39 = arith.constant 0 : index
    %c0_40 = arith.constant 0 : index
    %54 = vector.load %arg9[%c1_38, %c0_39, %c0_40] : memref<2x16x1xf32, #tpu.memory_space<vmem>>, vector<1x16x1xf32>
    %55 = vector.shape_cast %54 : vector<1x16x1xf32> to vector<16x1xf32>
    %56 = vector.broadcast %55 : vector<16x1xf32> to vector<16x32xf32>
    %57 = arith.addf %53, %56 : vector<16x32xf32>
    %c0_41 = arith.constant 0 : index
    %c0_42 = arith.constant 0 : index
    %c0_43 = arith.constant 0 : index
    %58 = vector.load %arg11[%c0_41, %c0_42, %c0_43] : memref<1x16x32xf32, #tpu.memory_space<vmem>>, vector<1x16x32xf32>
    %59 = vector.shape_cast %58 : vector<1x16x32xf32> to vector<16x32xf32>
    %60 = vector.shape_cast %57 : vector<16x32xf32> to vector<1x16x32xf32>
    tpu.vector_store %arg11[%c0_41, %c0_42, %c0_43], %60 {strides = array<i32>} : memref<1x16x32xf32, #tpu.memory_space<vmem>>, vector<1x16x32xf32>,
    return
  }
  func.func @transform_0(%arg0: i32) -> (i32, i32, i32) {
    %c0_i32 = arith.constant 0 : i32
    %c0_i32_0 = arith.constant 0 : i32
    %c0_i32_1 = arith.constant 0 : i32
    return %arg0, %c0_i32, %c0_i32_0 : i32, i32, i32
  }
  func.func @transform_1(%arg0: i32) -> (i32, i32) {
    %c0_i32 = arith.constant 0 : i32
    %c0_i32_0 = arith.constant 0 : i32
    %c0_i32_1 = arith.constant 0 : i32
    return %c0_i32, %c0_i32_0 : i32, i32
  }
  func.func @transform_2(%arg0: i32) -> (i32, i32) {
    %c0_i32 = arith.constant 0 : i32
    %c0_i32_0 = arith.constant 0 : i32
    %c0_i32_1 = arith.constant 0 : i32
    return %c0_i32, %c0_i32_0 : i32, i32
  }
  func.func @transform_3(%arg0: i32) -> (i32, i32) {
    %c0_i32 = arith.constant 0 : i32
    %c0_i32_0 = arith.constant 0 : i32
    %c0_i32_1 = arith.constant 0 : i32
    return %c0_i32, %c0_i32_0 : i32, i32
  }
  func.func @transform_4(%arg0: i32) -> (i32, i32) {
    %c0_i32 = arith.constant 0 : i32
    %c0_i32_0 = arith.constant 0 : i32
    %c0_i32_1 = arith.constant 0 : i32
    return %c0_i32, %c0_i32_0 : i32, i32
  }
  func.func @transform_5(%arg0: i32) -> (i32, i32) {
    %c0_i32 = arith.constant 0 : i32
    %c0_i32_0 = arith.constant 0 : i32
    %c0_i32_1 = arith.constant 0 : i32
    return %c0_i32, %c0_i32_0 : i32, i32
  }
  func.func @transform_6(%arg0: i32) -> (i32, i32, i32) {
    %c0_i32 = arith.constant 0 : i32
    %c0_i32_0 = arith.constant 0 : i32
    %c0_i32_1 = arith.constant 0 : i32
    %c0_i32_2 = arith.constant 0 : i32
    return %c0_i32, %c0_i32_0, %c0_i32_1 : i32, i32, i32
  }
  func.func @transform_7(%arg0: i32) -> (i32, i32, i32) {
    %c0_i32 = arith.constant 0 : i32
    %c0_i32_0 = arith.constant 0 : i32
    %c0_i32_1 = arith.constant 0 : i32
    %c0_i32_2 = arith.constant 0 : i32
    return %c0_i32, %c0_i32_0, %c0_i32_1 : i32, i32, i32
  }
  func.func @transform_8(%arg0: i32) -> (i32, i32, i32) {
    %c0_i32 = arith.constant 0 : i32
    %c0_i32_0 = arith.constant 0 : i32
    %c0_i32_1 = arith.constant 0 : i32
    %c0_i32_2 = arith.constant 0 : i32
    return %c0_i32, %c0_i32_0, %c0_i32_1 : i32, i32, i32
  }
  func.func @transform_9(%arg0: i32) -> (i32, i32, i32) {
    %c0_i32 = arith.constant 0 : i32
    %c0_i32_0 = arith.constant 0 : i32
    %c0_i32_1 = arith.constant 0 : i32
    return %arg0, %c0_i32, %c0_i32_0 : i32, i32, i32
  }
  func.func @transform_10(%arg0: i32) -> (i32, i32, i32) {
    %c0_i32 = arith.constant 0 : i32
    %c0_i32_0 = arith.constant 0 : i32
    %c0_i32_1 = arith.constant 0 : i32
    return %arg0, %c0_i32, %c0_i32_0 : i32, i32, i32
  }
}

</mosaic_0001>

<llo_original>
// kernel: tpu_custom_call.1
$region0: #{tpu_custom_call.1}
  #allocation0 [shape = 'u32[]', space=smem, size = 0x4, offset = 0x4, fixed_abs, tag = 'smem constant byte address 0x4 - core index']
  #allocation1 [shape = 'u32[144,128]{1,0:T(1,128)}', space=vmem, size = 0x12000, scoped, tag = 'internal scratch']
  %s0 = inlined_call_operand.vmem [shape: f32[2,16,256], index: 0, kind: input, shape index: {}]
  %s1 = inlined_call_operand.vmem [shape: f32[256,96], index: 1, kind: input, shape index: {}]
  %s2 = inlined_call_operand.vmem [shape: f32[4,16], index: 2, kind: input, shape index: {}]
  %s3 = inlined_call_operand.vmem [shape: f32[4,1], index: 3, kind: input, shape index: {}]
  %s4 = inlined_call_operand.vmem [shape: f32[8,12], index: 4, kind: input, shape index: {}]
  %s5 = inlined_call_operand.vmem [shape: f32[8,1], index: 5, kind: input, shape index: {}]
  %s6 = inlined_call_operand.vmem [shape: f32[2,33,64], index: 6, kind: input, shape index: {}]
  %s7 = inlined_call_operand.vmem [shape: f32[2,16,8], index: 7, kind: input, shape index: {}]
  %s8 = inlined_call_operand.vmem [shape: f32[2,16,1], index: 8, kind: input, shape index: {}]
  %s9 = inlined_call_operand.hbm [shape: f32[2,16,32], index: 9, kind: output, shape index: {0}]
  %s10 = inlined_call_operand.hbm [shape: f32[2,16,32], index: 10, kind: output, shape index: {1}]
  %11 = xla_tuple %s9, %s10
  %s12 = sld [smem:[#allocation0]]
  $region77: #{tpu_custom_call.1} parent=0
    _
  %s14 = ssub.s32 1, %s12
  %s15 = scalar_select 0, %s14, %s12
  $region1: #{tpu_custom_call.1} parent=0
    #allocation2 [shape = 'u8[16384]{0}', space=vmem, size = 0x4000, scoped, tag = 'output window, operand 0']
    #allocation3 [shape = 's32[2]{0}', space=sflag, size = 0x8, scoped, tag = 'scoped memory for tpu_custom_call.1']
    #allocation4 [shape = 'u8[16384]{0}', space=vmem, size = 0x4000, scoped, tag = 'output window, operand 1']
    #allocation5 [shape = 's32[2]{0}', space=sflag, size = 0x8, scoped, tag = 'scoped memory for tpu_custom_call.1']
    %16 = vsyncpa [#allocation3], 0
    %s17 = scalar_lea.sflag [#allocation3], 1
    %18 = vsyncpa %s17, 0
    %19 = vsyncpa [#allocation5], 0
    %s20 = scalar_lea.sflag [#allocation5], 1
    %21 = vsyncpa %s20, 0
    loop: start=0, step=1, limit=4
    $region2: #{tpu_custom_call.1} parent=1 // loop_pre_header
      _
    $region3: #{tpu_custom_call.1} parent=1 // loop_header
      %s23 = sphi 0, %s27
      %p24 = scmp.ge.s32.totalorder %s23, 4
      %s33 = sphi 0, %s35
      %s36 = sphi 0, %s33
      %s37 = sphi 0, %s36
      %s53 = sphi 0, %s37
      %s57 = sphi 0, %s57
      %s59 = sphi 0, %s57
      %s60 = sphi 0, %s59
      %s74 = sphi 0, %s60
      %s78 = sphi 0, %s78
      %s80 = sphi 0, %s78
      %s81 = sphi 0, %s80
      %s95 = sphi 0, %s81
      %s99 = sphi 0, %s99
      %s101 = sphi 0, %s99
      %s102 = sphi 0, %s101
      %s116 = sphi 0, %s102
      %s120 = sphi 0, %s120
      %s122 = sphi 0, %s120
      %s123 = sphi 0, %s122
      %s137 = sphi 0, %s123
      %s141 = sphi 0, %s141
      %s143 = sphi 0, %s141
      %s144 = sphi 0, %s143
      %s158 = sphi 0, %s144
      %s162 = sphi 0, %s162
      %s164 = sphi 0, %s162
      %s165 = sphi 0, %s164
      %s179 = sphi 0, %s165
      %s183 = sphi 0, %s183
      %s185 = sphi 0, %s183
      %s186 = sphi 0, %s185
      %s200 = sphi 0, %s186
      %s204 = sphi 0, %s204
      %s206 = sphi 0, %s204
      %s207 = sphi 0, %s206
      %s221 = sphi 0, %s207
      %s227 = sphi 0, %s229
      %s230 = sphi 0, %s227
      %s231 = sphi 0, %s230
      %s247 = sphi 0, %s231
      %s253 = sphi 0, %s255
      %s256 = sphi 0, %s253
      %s257 = sphi 0, %s256
      %s273 = sphi 0, %s257
    $region4: #{tpu_custom_call.1} parent=1 // loop_header_branch
      %26 = sbr.rel (%p24) target = $region8
    $region5: #{tpu_custom_call.1} parent=1 // loop_body
      %s28 = ssub.s32 %s23, 1
      %s29 = ssub.s32 %s23, 2
      %s30 = sadd.s32 %s23, 1
      %s31 = ssub.s32 %s23, %s30
      %p32 = scmp.eq.s32.totalorder %s31, 0
      %s34 = sadd.s32 %s33, 1
      %s35 = scalar_select %p32, %s33, %s34
      %p38 = pneg %p32
      %p39 = scmp.eq.s32.totalorder %s23, 1
      %p40 = por %p38, %p39
      %p41 = scmp.ne.s32.totalorder %s33, %s36
      %p42 = scmp.eq.s32.totalorder %s23, 0
      %p43 = por %p41, %p42
      %p44 = scmp.ne.s32.totalorder %s33, %s36
      %p45 = scmp.eq.s32.totalorder %s28, 1
      %p46 = por %p44, %p45
      %p47 = scmp.ne.s32.totalorder %s36, %s37
      %p48 = scmp.eq.s32.totalorder %s28, 0
      %p49 = por %p47, %p48
      %p50 = scmp.ne.s32.totalorder %s36, %s37
      %p51 = scmp.eq.s32.totalorder %s29, 1
      %p52 = por %p50, %p51
      %p54 = scmp.ne.s32.totalorder %s37, %s53
      %p55 = scmp.eq.s32.totalorder %s29, 0
      %p56 = por %p54, %p55
      %s58 = sadd.s32 %s57, 1
      %p61 = scmp.eq.s32.totalorder %s23, 1
      %p62 = scmp.ne.s32.totalorder %s57, %s59
      %p63 = scmp.eq.s32.totalorder %s23, 0
      %p64 = por %p62, %p63
      %p65 = scmp.ne.s32.totalorder %s57, %s59
      %p66 = scmp.eq.s32.totalorder %s28, 1
      %p67 = por %p65, %p66
      %p68 = scmp.ne.s32.totalorder %s59, %s60
      %p69 = scmp.eq.s32.totalorder %s28, 0
      %p70 = por %p68, %p69
      %p71 = scmp.ne.s32.totalorder %s59, %s60
      %p72 = scmp.eq.s32.totalorder %s29, 1
      %p73 = por %p71, %p72
      %p75 = scmp.ne.s32.totalorder %s60, %s74
      %p76 = scmp.eq.s32.totalorder %s29, 0
      %p77 = por %p75, %p76
      %s79 = sadd.s32 %s78, 1
      %p82 = scmp.eq.s32.totalorder %s23, 1
      %p83 = scmp.ne.s32.totalorder %s78, %s80
      %p84 = scmp.eq.s32.totalorder %s23, 0
      %p85 = por %p83, %p84
      %p86 = scmp.ne.s32.totalorder %s78, %s80
      %p87 = scmp.eq.s32.totalorder %s28, 1
      %p88 = por %p86, %p87
      %p89 = scmp.ne.s32.totalorder %s80, %s81
      %p90 = scmp.eq.s32.totalorder %s28, 0
      %p91 = por %p89, %p90
      %p92 = scmp.ne.s32.totalorder %s80, %s81
      %p93 = scmp.eq.s32.totalorder %s29, 1
      %p94 = por %p92, %p93
      %p96 = scmp.ne.s32.totalorder %s81, %s95
      %p97 = scmp.eq.s32.totalorder %s29, 0
      %p98 = por %p96, %p97
      %s100 = sadd.s32 %s99, 1
      %p103 = scmp.eq.s32.totalorder %s23, 1
      %p104 = scmp.ne.s32.totalorder %s99, %s101
      %p105 = scmp.eq.s32.totalorder %s23, 0
      %p106 = por %p104, %p105
      %p107 = scmp.ne.s32.totalorder %s99, %s101
      %p108 = scmp.eq.s32.totalorder %s28, 1
      %p109 = por %p107, %p108
      %p110 = scmp.ne.s32.totalorder %s101, %s102
      %p111 = scmp.eq.s32.totalorder %s28, 0
      %p112 = por %p110, %p111
      %p113 = scmp.ne.s32.totalorder %s101, %s102
      %p114 = scmp.eq.s32.totalorder %s29, 1
      %p115 = por %p113, %p114
      %p117 = scmp.ne.s32.totalorder %s102, %s116
      %p118 = scmp.eq.s32.totalorder %s29, 0
      %p119 = por %p117, %p118
      %s121 = sadd.s32 %s120, 1
      %p124 = scmp.eq.s32.totalorder %s23, 1
      %p125 = scmp.ne.s32.totalorder %s120, %s122
      %p126 = scmp.eq.s32.totalorder %s23, 0
      %p127 = por %p125, %p126
      %p128 = scmp.ne.s32.totalorder %s120, %s122
      %p129 = scmp.eq.s32.totalorder %s28, 1
      %p130 = por %p128, %p129
      %p131 = scmp.ne.s32.totalorder %s122, %s123
      %p132 = scmp.eq.s32.totalorder %s28, 0
      %p133 = por %p131, %p132
      %p134 = scmp.ne.s32.totalorder %s122, %s123
      %p135 = scmp.eq.s32.totalorder %s29, 1
      %p136 = por %p134, %p135
      %p138 = scmp.ne.s32.totalorder %s123, %s137
      %p139 = scmp.eq.s32.totalorder %s29, 0
      %p140 = por %p138, %p139
      %s142 = sadd.s32 %s141, 1
      %p145 = scmp.eq.s32.totalorder %s23, 1
      %p146 = scmp.ne.s32.totalorder %s141, %s143
      %p147 = scmp.eq.s32.totalorder %s23, 0
      %p148 = por %p146, %p147
      %p149 = scmp.ne.s32.totalorder %s141, %s143
      %p150 = scmp.eq.s32.totalorder %s28, 1
      %p151 = por %p149, %p150
      %p152 = scmp.ne.s32.totalorder %s143, %s144
      %p153 = scmp.eq.s32.totalorder %s28, 0
      %p154 = por %p152, %p153
      %p155 = scmp.ne.s32.totalorder %s143, %s144
      %p156 = scmp.eq.s32.totalorder %s29, 1
      %p157 = por %p155, %p156
      %p159 = scmp.ne.s32.totalorder %s144, %s158
      %p160 = scmp.eq.s32.totalorder %s29, 0
      %p161 = por %p159, %p160
      %s163 = sadd.s32 %s162, 1
      %p166 = scmp.eq.s32.totalorder %s23, 1
      %p167 = scmp.ne.s32.totalorder %s162, %s164
      %p168 = scmp.eq.s32.totalorder %s23, 0
      %p169 = por %p167, %p168
      %p170 = scmp.ne.s32.totalorder %s162, %s164
      %p171 = scmp.eq.s32.totalorder %s28, 1
      %p172 = por %p170, %p171
      %p173 = scmp.ne.s32.totalorder %s164, %s165
      %p174 = scmp.eq.s32.totalorder %s28, 0
      %p175 = por %p173, %p174
      %p176 = scmp.ne.s32.totalorder %s164, %s165
      %p177 = scmp.eq.s32.totalorder %s29, 1
      %p178 = por %p176, %p177
      %p180 = scmp.ne.s32.totalorder %s165, %s179
      %p181 = scmp.eq.s32.totalorder %s29, 0
      %p182 = por %p180, %p181
      %s184 = sadd.s32 %s183, 1
      %p187 = scmp.eq.s32.totalorder %s23, 1
      %p188 = scmp.ne.s32.totalorder %s183, %s185
      %p189 = scmp.eq.s32.totalorder %s23, 0
      %p190 = por %p188, %p189
      %p191 = scmp.ne.s32.totalorder %s183, %s185
      %p192 = scmp.eq.s32.totalorder %s28, 1
      %p193 = por %p191, %p192
      %p194 = scmp.ne.s32.totalorder %s185, %s186
      %p195 = scmp.eq.s32.totalorder %s28, 0
      %p196 = por %p194, %p195
      %p197 = scmp.ne.s32.totalorder %s185, %s186
      %p198 = scmp.eq.s32.totalorder %s29, 1
      %p199 = por %p197, %p198
      %p201 = scmp.ne.s32.totalorder %s186, %s200
      %p202 = scmp.eq.s32.totalorder %s29, 0
      %p203 = por %p201, %p202
      %s205 = sadd.s32 %s204, 1
      %p208 = scmp.eq.s32.totalorder %s23, 1
      %p209 = scmp.ne.s32.totalorder %s204, %s206
      %p210 = scmp.eq.s32.totalorder %s23, 0
      %p211 = por %p209, %p210
      %p212 = scmp.ne.s32.totalorder %s204, %s206
      %p213 = scmp.eq.s32.totalorder %s28, 1
      %p214 = por %p212, %p213
      %p215 = scmp.ne.s32.totalorder %s206, %s207
      %p216 = scmp.eq.s32.totalorder %s28, 0
      %p217 = por %p215, %p216
      %p218 = scmp.ne.s32.totalorder %s206, %s207
      %p219 = scmp.eq.s32.totalorder %s29, 1
      %p220 = por %p218, %p219
      %p222 = scmp.ne.s32.totalorder %s207, %s221
      %p223 = scmp.eq.s32.totalorder %s29, 0
      %p224 = por %p222, %p223
      %s225 = ssub.s32 %s23, %s30
      %p226 = scmp.eq.s32.totalorder %s225, 0
      %s228 = sadd.s32 %s227, 1
      %s229 = scalar_select %p226, %s227, %s228
      %p232 = pneg %p226
      %p233 = scmp.eq.s32.totalorder %s23, 1
      %p234 = por %p232, %p233
      %p235 = scmp.ne.s32.totalorder %s227, %s230
      %p236 = scmp.eq.s32.totalorder %s23, 0
      %p237 = por %p235, %p236
      %p238 = scmp.ne.s32.totalorder %s227, %s230
      %p239 = scmp.eq.s32.totalorder %s28, 1
      %p240 = por %p238, %p239
      %p241 = scmp.ne.s32.totalorder %s230, %s231
      %p242 = scmp.eq.s32.totalorder %s28, 0
      %p243 = por %p241, %p242
      %p244 = scmp.ne.s32.totalorder %s230, %s231
      %p245 = scmp.eq.s32.totalorder %s29, 1
      %p246 = por %p244, %p245
      %p248 = scmp.ne.s32.totalorder %s231, %s247
      %p249 = scmp.eq.s32.totalorder %s29, 0
      %p250 = por %p248, %p249
      %s251 = ssub.s32 %s23, %s30
      %p252 = scmp.eq.s32.totalorder %s251, 0
      %s254 = sadd.s32 %s253, 1
      %s255 = scalar_select %p252, %s253, %s254
      %p258 = pneg %p252
      %p259 = scmp.eq.s32.totalorder %s23, 1
      %p260 = por %p258, %p259
      %p261 = scmp.ne.s32.totalorder %s253, %s256
      %p262 = scmp.eq.s32.totalorder %s23, 0
      %p263 = por %p261, %p262
      %p264 = scmp.ne.s32.totalorder %s253, %s256
      %p265 = scmp.eq.s32.totalorder %s28, 1
      %p266 = por %p264, %p265
      %p267 = scmp.ne.s32.totalorder %s256, %s257
      %p268 = scmp.eq.s32.totalorder %s28, 0
      %p269 = por %p267, %p268
      %p270 = scmp.ne.s32.totalorder %s256, %s257
      %p271 = scmp.eq.s32.totalorder %s29, 1
      %p272 = por %p270, %p271
      %p274 = scmp.ne.s32.totalorder %s257, %s273
      %p275 = scmp.eq.s32.totalorder %s29, 0
      %p276 = por %p274, %p275
      %p277 = scmp.le.s32.totalorder 1, %s23
      %p278 = scmp.lt.s32.totalorder %s23, 3
      %p279 = pnand %p277, %p278
      %p280 = pneg %p279
      // Predicated region
      $region9: #{tpu_custom_call.1} parent=5 // pred_check
        _
      $region10: #{tpu_custom_call.1} parent=5 // pred_check_branch
        %282 = sbr.rel (%p279) target = $region12
      $region11: #{tpu_custom_call.1} parent=5 // pred_region
        %s283 = ssub.s32 %s23, 1
        // Predicated region
        $region13: #{tpu_custom_call.1} parent=11 // pred_check
          %p284 = pneg %p70
        $region14: #{tpu_custom_call.1} parent=11 // pred_check_branch
          %286 = sbr.rel (%p284) target = $region16
        $region15: #{tpu_custom_call.1} parent=11 // pred_region
          _
        $region16: #{tpu_custom_call.1} parent=11 // pred_fallthru
          _
        // Predicated region
        $region17: #{tpu_custom_call.1} parent=11 // pred_check
          %p287 = pneg %p91
        $region18: #{tpu_custom_call.1} parent=11 // pred_check_branch
          %289 = sbr.rel (%p287) target = $region20
        $region19: #{tpu_custom_call.1} parent=11 // pred_region
          _
        $region20: #{tpu_custom_call.1} parent=11 // pred_fallthru
          _
        // Predicated region
        $region21: #{tpu_custom_call.1} parent=11 // pred_check
          %p290 = pneg %p112
        $region22: #{tpu_custom_call.1} parent=11 // pred_check_branch
          %292 = sbr.rel (%p290) target = $region24
        $region23: #{tpu_custom_call.1} parent=11 // pred_region
          _
        $region24: #{tpu_custom_call.1} parent=11 // pred_fallthru
          _
        // Predicated region
        $region25: #{tpu_custom_call.1} parent=11 // pred_check
          %p293 = pneg %p133
        $region26: #{tpu_custom_call.1} parent=11 // pred_check_branch
          %295 = sbr.rel (%p293) target = $region28
        $region27: #{tpu_custom_call.1} parent=11 // pred_region
          _
        $region28: #{tpu_custom_call.1} parent=11 // pred_fallthru
          _
        // Predicated region
        $region29: #{tpu_custom_call.1} parent=11 // pred_check
          %p296 = pneg %p154
        $region30: #{tpu_custom_call.1} parent=11 // pred_check_branch
          %298 = sbr.rel (%p296) target = $region32
        $region31: #{tpu_custom_call.1} parent=11 // pred_region
          _
        $region32: #{tpu_custom_call.1} parent=11 // pred_fallthru
          _
        // Predicated region
        $region33: #{tpu_custom_call.1} parent=11 // pred_check
          %p299 = pneg %p175
        $region34: #{tpu_custom_call.1} parent=11 // pred_check_branch
          %301 = sbr.rel (%p299) target = $region36
        $region35: #{tpu_custom_call.1} parent=11 // pred_region
          _
        $region36: #{tpu_custom_call.1} parent=11 // pred_fallthru
          _
        // Predicated region
        $region37: #{tpu_custom_call.1} parent=11 // pred_check
          %p302 = pneg %p196
        $region38: #{tpu_custom_call.1} parent=11 // pred_check_branch
          %304 = sbr.rel (%p302) target = $region40
        $region39: #{tpu_custom_call.1} parent=11 // pred_region
          _
        $region40: #{tpu_custom_call.1} parent=11 // pred_fallthru
          _
        // Predicated region
        $region41: #{tpu_custom_call.1} parent=11 // pred_check
          %p305 = pneg %p217
        $region42: #{tpu_custom_call.1} parent=11 // pred_check_branch
          %307 = sbr.rel (%p305) target = $region44
        $region43: #{tpu_custom_call.1} parent=11 // pred_region
          _
        $region44: #{tpu_custom_call.1} parent=11 // pred_fallthru
          _
      $region12: #{tpu_custom_call.1} parent=5 // pred_fallthru
        _
      %p308 = scmp.lt.s32.totalorder %s23, 2
      // Predicated region
      $region45: #{tpu_custom_call.1} parent=5 // pred_check
        %p309 = pneg %p308
      $region46: #{tpu_custom_call.1} parent=5 // pred_check_branch
        %311 = sbr.rel (%p309) target = $region48
      $region47: #{tpu_custom_call.1} parent=5 // pred_region
        // Predicated region
        $region49: #{tpu_custom_call.1} parent=47 // pred_check
          %p312 = pneg %p43
        $region50: #{tpu_custom_call.1} parent=47 // pred_check_branch
          %314 = sbr.rel (%p312) target = $region52
        $region51: #{tpu_custom_call.1} parent=47 // pred_region
          %p315 = scmp.lt.s32.totalorder %s23, 1
          %s316 = scalar_select %p315, %s23, 1
          %s317 = smul.addr %s316, 4
          %s318 = smul.addr %s317, 8
          %s319 = scalar_lea.vmem %s0, %s318
        $region52: #{tpu_custom_call.1} parent=47 // pred_fallthru
          _
      $region48: #{tpu_custom_call.1} parent=5 // pred_fallthru
        _
      %p320 = scmp.le.s32.totalorder 1, %s23
      %p321 = scmp.lt.s32.totalorder %s23, 3
      %p322 = pnand %p320, %p321
      %p323 = pneg %p322
      // Predicated region
      $region53: #{tpu_custom_call.1} parent=5 // pred_check
        _
      $region54: #{tpu_custom_call.1} parent=5 // pred_check_branch
        %325 = sbr.rel (%p322) target = $region56
      $region55: #{tpu_custom_call.1} parent=5 // pred_region
        %s326 = ssub.s32 %s23, 1
        %p327 = scmp.lt.s32.totalorder %s28, 1
        %s328 = scalar_select %p327, %s28, 1
        %s329 = smul.addr %s328, 4
        %s330 = smul.addr %s329, 8
        %s331 = scalar_lea.vmem %s0, %s330
        %p332 = pneg %p49
        %p333 = pneg %p46
        %p334 = pneg %p70
        %p335 = pneg %p67
        %p336 = pneg %p91
        %p337 = pneg %p88
        %p338 = pneg %p112
        %p339 = pneg %p109
        %p340 = pneg %p133
        %p341 = pneg %p130
        %p342 = pneg %p154
        %p343 = pneg %p151
        %p344 = pneg %p175
        %p345 = pneg %p172
        %p346 = pneg %p196
        %p347 = pneg %p193
        %p348 = pneg %p217
        %p349 = pneg %p214
        %p350 = pneg %p243
        %p351 = pneg %p240
        %s352 = sand.u32 %s230, 1
        %s353 = scalar_lea.sflag [#allocation3], %s352
        %s354 = sand.u32 %s230, 1
        %s355 = smul.addr %s354, 16
        %s356 = scalar_lea.vmem [#allocation2], %s355
        %p357 = pneg %p269
        %p358 = pneg %p266
        %s359 = sand.u32 %s256, 1
        %s360 = scalar_lea.sflag [#allocation5], %s359
        %s361 = sand.u32 %s256, 1
        %s362 = smul.addr %s361, 16
        %s363 = scalar_lea.vmem [#allocation4], %s362
        %p364 = scmp.lt.s32.totalorder %s28, 1
        %s365 = scalar_select %p364, %s28, 1
        %s366 = smul.addr %s365, 4
        %s367 = smul.addr %s366, 8
        %s368 = scalar_lea.vmem %s0, %s367
        %v369 = vld [vmem:[%s368] sm:$0xff]
        %v370 = vld [vmem:[%s368 + $0x8] sm:$0xff]
        %v371 = vld [vmem:[%s368 + $0x10] sm:$0xff]
        %v372 = vld [vmem:[%s368 + $0x18] sm:$0xff]
        %v373 = vld [vmem:[%s1] sm:$0xff]
        %v374 = vld [vmem:[%s1 + $0x8] sm:$0xff]
        %v375 = vld [vmem:[%s1 + $0x10] sm:$0xff]
        %v376 = vld [vmem:[%s1 + $0x18] sm:$0xff]
        %v377 = vld [vmem:[%s1 + $0x20] sm:$0xff]
        %v378 = vld [vmem:[%s1 + $0x28] sm:$0xff]
        %v379 = vld [vmem:[%s1 + $0x30] sm:$0xff]
        %v380 = vld [vmem:[%s1 + $0x38] sm:$0xff]
        %v381 = vld [vmem:[%s1 + $0x40] sm:$0xff]
        %v382 = vld [vmem:[%s1 + $0x48] sm:$0xff]
        %v383 = vld [vmem:[%s1 + $0x50] sm:$0xff]
        %v384 = vld [vmem:[%s1 + $0x58] sm:$0xff]
        %v385 = vld [vmem:[%s1 + $0x60] sm:$0xff]
        %v386 = vld [vmem:[%s1 + $0x68] sm:$0xff]
        %v387 = vld [vmem:[%s1 + $0x70] sm:$0xff]
        %v388 = vld [vmem:[%s1 + $0x78] sm:$0xff]
        %v389 = vld [vmem:[%s1 + $0x80] sm:$0xff]
        %v390 = vld [vmem:[%s1 + $0x88] sm:$0xff]
        %v391 = vld [vmem:[%s1 + $0x90] sm:$0xff]
        %v392 = vld [vmem:[%s1 + $0x98] sm:$0xff]
        %v393 = vld [vmem:[%s1 + $0xa0] sm:$0xff]
        %v394 = vld [vmem:[%s1 + $0xa8] sm:$0xff]
        %v395 = vld [vmem:[%s1 + $0xb0] sm:$0xff]
        %v396 = vld [vmem:[%s1 + $0xb8] sm:$0xff]
        %v397 = vld [vmem:[%s1 + $0xc0] sm:$0xff]
        %v398 = vld [vmem:[%s1 + $0xc8] sm:$0xff]
        %v399 = vld [vmem:[%s1 + $0xd0] sm:$0xff]
        %v400 = vld [vmem:[%s1 + $0xd8] sm:$0xff]
        %v401 = vld [vmem:[%s1 + $0xe0] sm:$0xff]
        %v402 = vld [vmem:[%s1 + $0xe8] sm:$0xff]
        %v403 = vld [vmem:[%s1 + $0xf0] sm:$0xff]
        %v404 = vld [vmem:[%s1 + $0xf8] sm:$0xff]
        %405 = vmatprep.subr.mxu0 0.0
        %406 = vmatpush1.msra.mxu0 %v388
        %407 = vmatprep.subr.mxu0 0.0
        %408 = vmatpush1.msra.mxu0 %v387
        %409 = vmatprep.subr.mxu0 0.0
        %410 = vmatpush1.msra.mxu0 %v386
        %411 = vmatprep.subr.mxu0 0.0
        %412 = vmatpush1.msra.mxu0 %v385
        %413 = vmatprep.subr.mxu0 0.0
        %414 = vmatpush1.msra.mxu0 %v384
        %415 = vmatprep.subr.mxu0 0.0
        %416 = vmatpush1.msra.mxu0 %v383
        %417 = vmatprep.subr.mxu0 0.0
        %418 = vmatpush1.msra.mxu0 %v382
        %419 = vmatprep.subr.mxu0 0.0
        %420 = vmatpush1.msra.mxu0 %v381
        %421 = vmatprep.subr.mxu0 0.0
        %422 = vmatpush1.msra.mxu0 %v380
        %423 = vmatprep.subr.mxu0 0.0
        %424 = vmatpush1.msra.mxu0 %v379
        %425 = vmatprep.subr.mxu0 0.0
        %426 = vmatpush1.msra.mxu0 %v378
        %427 = vmatprep.subr.mxu0 0.0
        %428 = vmatpush1.msra.mxu0 %v377
        %429 = vmatprep.subr.mxu0 0.0
        %430 = vmatpush1.msra.mxu0 %v376
        %431 = vmatprep.subr.mxu0 0.0
        %432 = vmatpush1.msra.mxu0 %v375
        %433 = vmatprep.subr.mxu0 0.0
        %434 = vmatpush1.msra.mxu0 %v374
        %435 = vmatprep.subr.mxu0 0.0
        %436 = vmatpush1.msra.mxu0 %v373
        %437 = vmatprep.subr.mxu0 0.0
        %438 = vmatpush2.msra.mxu0 %v404
        %439 = vmatprep.subr.mxu0 0.0
        %440 = vmatpush2.msra.mxu0 %v403
        %441 = vmatprep.subr.mxu0 0.0
        %442 = vmatpush2.msra.mxu0 %v402
        %443 = vmatprep.subr.mxu0 0.0
        %444 = vmatpush2.msra.mxu0 %v401
        %445 = vmatprep.subr.mxu0 0.0
        %446 = vmatpush2.msra.mxu0 %v400
        %447 = vmatprep.subr.mxu0 0.0
        %448 = vmatpush2.msra.mxu0 %v399
        %449 = vmatprep.subr.mxu0 0.0
        %450 = vmatpush2.msra.mxu0 %v398
        %451 = vmatprep.subr.mxu0 0.0
        %452 = vmatpush2.msra.mxu0 %v397
        %453 = vmatprep.subr.mxu0 0.0
        %454 = vmatpush2.msra.mxu0 %v396
        %455 = vmatprep.subr.mxu0 0.0
        %456 = vmatpush2.msra.mxu0 %v395
        %457 = vmatprep.subr.mxu0 0.0
        %458 = vmatpush2.msra.mxu0 %v394
        %459 = vmatprep.subr.mxu0 0.0
        %460 = vmatpush2.msra.mxu0 %v393
        %461 = vmatprep.subr.mxu0 0.0
        %462 = vmatpush2.msra.mxu0 %v392
        %463 = vmatprep.subr.mxu0 0.0
        %464 = vmatpush2.msra.mxu0 %v391
        %465 = vmatprep.subr.mxu0 0.0
        %466 = vmatpush2.msra.mxu0 %v390
        %467 = vmatprep.subr.mxu0 0.0
        %468 = vmatpush2.msra.mxu0 %v389
        %469 = vmatprep.mubr.f32.mxu0 %v370
        %470 = vmatmul.mubr.f32.gmra.mxu0 %v369
        %v471 = vpop.f32.mrf.mxu0
        %v472 = vadd.f32 0.0, %v471
        %v473 = vpop.f32.mrf.mxu0
        %474 = vmatprep.mubr.f32.mxu0 %v372
        %475 = vmatmul.mubr.f32.gmra.mxu0 %v371
        %v476 = vpop.f32.mrf.mxu0
        %v477 = vadd.f32 0.0, %v476
        %v478 = vpop.f32.mrf.mxu0
        %479 = vdwg.mxu0
        %v480 = vld [vmem:[%s2] sm:$0xf]
        %v481 = vld [vmem:[%s3] sm:$0xf]
        %483 = vset.pattern.permute.xlu0 0
        %484 = vperm.xlu0 %483, %v481
        %v485 = vpop.permute.xlu0 %484
        %vm487 = vcmask 130048
        %v489 = vsel %vm487, %v480, 0
        %491 = vmatprep.subr.mxu0 0.0
        %492 = vmatpush1.msra.mxu0 0.0
        %493 = vmatprep.subr.mxu0 0.0
        %494 = vmatpush1.msra.mxu0 0.0
        %495 = vmatprep.subr.mxu0 0.0
        %496 = vmatpush1.msra.mxu0 0.0
        %497 = vmatprep.subr.mxu0 0.0
        %498 = vmatpush1.msra.mxu0 0.0
        %499 = vmatprep.subr.mxu0 0.0
        %500 = vmatpush1.msra.mxu0 0.0
        %501 = vmatprep.subr.mxu0 0.0
        %502 = vmatpush1.msra.mxu0 0.0
        %503 = vmatprep.subr.mxu0 0.0
        %504 = vmatpush1.msra.mxu0 0.0
        %505 = vmatprep.subr.mxu0 0.0
        %506 = vmatpush1.msra.mxu0 0.0
        %507 = vmatprep.subr.mxu0 0.0
        %508 = vmatpush1.msra.mxu0 0.0
        %509 = vmatprep.subr.mxu0 0.0
        %510 = vmatpush1.msra.mxu0 0.0
        %511 = vmatprep.subr.mxu0 0.0
        %512 = vmatpush1.msra.mxu0 0.0
        %513 = vmatprep.subr.mxu0 0.0
        %514 = vmatpush1.msra.mxu0 0.0
        %515 = vmatprep.subr.mxu0 0.0
        %516 = vmatpush1.msra.mxu0 0.0
        %517 = vmatprep.subr.mxu0 0.0
        %518 = vmatpush1.msra.mxu0 0.0
        %519 = vmatprep.subr.mxu0 0.0
        %520 = vmatpush1.msra.mxu0 %v477
        %521 = vmatprep.subr.mxu0 0.0
        %522 = vmatpush1.msra.mxu0 %v472
        %523 = vmatprep.subr.mxu0 0.0
        %524 = vmatpush2.msra.mxu0 0.0
        %525 = vmatprep.subr.mxu0 0.0
        %526 = vmatpush2.msra.mxu0 0.0
        %527 = vmatprep.subr.mxu0 0.0
        %528 = vmatpush2.msra.mxu0 0.0
        %529 = vmatprep.subr.mxu0 0.0
        %530 = vmatpush2.msra.mxu0 0.0
        %531 = vmatprep.subr.mxu0 0.0
        %532 = vmatpush2.msra.mxu0 0.0
        %533 = vmatprep.subr.mxu0 0.0
        %534 = vmatpush2.msra.mxu0 0.0
        %535 = vmatprep.subr.mxu0 0.0
        %536 = vmatpush2.msra.mxu0 0.0
        %537 = vmatprep.subr.mxu0 0.0
        %538 = vmatpush2.msra.mxu0 0.0
        %539 = vmatprep.subr.mxu0 0.0
        %540 = vmatpush2.msra.mxu0 0.0
        %541 = vmatprep.subr.mxu0 0.0
        %542 = vmatpush2.msra.mxu0 0.0
        %543 = vmatprep.subr.mxu0 0.0
        %544 = vmatpush2.msra.mxu0 0.0
        %545 = vmatprep.subr.mxu0 0.0
        %546 = vmatpush2.msra.mxu0 0.0
        %547 = vmatprep.subr.mxu0 0.0
        %548 = vmatpush2.msra.mxu0 0.0
        %549 = vmatprep.subr.mxu0 0.0
        %550 = vmatpush2.msra.mxu0 0.0
        %551 = vmatprep.subr.mxu0 0.0
        %552 = vmatpush2.msra.mxu0 0.0
        %553 = vmatprep.subr.mxu0 0.0
        %554 = vmatpush2.msra.mxu0 0.0
        %555 = vmatprep.mubr.f32.mxu0 0.0
        %556 = vmatmul.mubr.f32.gmra.mxu0 %v489
        %v557 = vpop.f32.mrf.mxu0
        %v558 = vadd.f32 %v485, %v557
        %v559 = vpop.f32.mrf.mxu0
        %560 = vdwg.mxu0
        %v561 = vmax.f32 %v558, 0.0
        %563 = vrot.lane.b32.xlu0 %v561, 1
        %v564 = vpop.permute.xlu0 %563
        %566 = vrot.lane.b32.xlu0 %v561, 2
        %v567 = vpop.permute.xlu0 %566
        %vm569 = vcmask 7168
        %v570 = vsel %vm569, 0.0, %v564
        %vm571 = vcmask 138240
        %v572 = vsel %vm571, %v570, 0.0
        %vm573 = vcmask 146432
        %v574 = vsel %vm573, %v572, %v567
        %vm575 = vcmask 277504
        %v576 = vsel %vm575, %v574, 0.0
        %v578 = vrot.slane %v576, 4
        %579 = vrot.lane.b32.xlu0 %v578, 127
        %v580 = vpop.permute.xlu0 %579
        %582 = vrot.lane.b32.xlu0 %v576, 126
        %v583 = vpop.permute.xlu0 %582
        %vm584 = vcmask 1043456
        %v585 = vsel %vm584, %v576, %v580
        %v586 = vld [vmem:[%s4] sm:$0xff]
        %v587 = vld [vmem:[%s5] sm:$0xff]
        %589 = vset.pattern.permute.xlu0 0
        %590 = vperm.xlu0 %589, %v587
        %v591 = vpop.permute.xlu0 %590
        %vm593 = vcmask 97280
        %v595 = vsel %vm593, %v586, 0
        %v597 = vsel %vm584, %v583, 0
        %599 = vmatprep.subr.mxu0 0.0
        %600 = vmatpush1.msra.mxu0 0.0
        %601 = vmatprep.subr.mxu0 0.0
        %602 = vmatpush1.msra.mxu0 0.0
        %603 = vmatprep.subr.mxu0 0.0
        %604 = vmatpush1.msra.mxu0 0.0
        %605 = vmatprep.subr.mxu0 0.0
        %606 = vmatpush1.msra.mxu0 0.0
        %607 = vmatprep.subr.mxu0 0.0
        %608 = vmatpush1.msra.mxu0 0.0
        %609 = vmatprep.subr.mxu0 0.0
        %610 = vmatpush1.msra.mxu0 0.0
        %611 = vmatprep.subr.mxu0 0.0
        %612 = vmatpush1.msra.mxu0 0.0
        %613 = vmatprep.subr.mxu0 0.0
        %614 = vmatpush1.msra.mxu0 0.0
        %615 = vmatprep.subr.mxu0 0.0
        %616 = vmatpush1.msra.mxu0 0.0
        %617 = vmatprep.subr.mxu0 0.0
        %618 = vmatpush1.msra.mxu0 0.0
        %619 = vmatprep.subr.mxu0 0.0
        %620 = vmatpush1.msra.mxu0 0.0
        %621 = vmatprep.subr.mxu0 0.0
        %622 = vmatpush1.msra.mxu0 0.0
        %623 = vmatprep.subr.mxu0 0.0
        %624 = vmatpush1.msra.mxu0 0.0
        %625 = vmatprep.subr.mxu0 0.0
        %626 = vmatpush1.msra.mxu0 0.0
        %627 = vmatprep.subr.mxu0 0.0
        %628 = vmatpush1.msra.mxu0 %v597
        %629 = vmatprep.subr.mxu0 0.0
        %630 = vmatpush1.msra.mxu0 %v585
        %631 = vmatprep.subr.mxu0 0.0
        %632 = vmatpush2.msra.mxu0 0.0
        %633 = vmatprep.subr.mxu0 0.0
        %634 = vmatpush2.msra.mxu0 0.0
        %635 = vmatprep.subr.mxu0 0.0
        %636 = vmatpush2.msra.mxu0 0.0
        %637 = vmatprep.subr.mxu0 0.0
        %638 = vmatpush2.msra.mxu0 0.0
        %639 = vmatprep.subr.mxu0 0.0
        %640 = vmatpush2.msra.mxu0 0.0
        %641 = vmatprep.subr.mxu0 0.0
        %642 = vmatpush2.msra.mxu0 0.0
        %643 = vmatprep.subr.mxu0 0.0
        %644 = vmatpush2.msra.mxu0 0.0
        %645 = vmatprep.subr.mxu0 0.0
        %646 = vmatpush2.msra.mxu0 0.0
        %647 = vmatprep.subr.mxu0 0.0
        %648 = vmatpush2.msra.mxu0 0.0
        %649 = vmatprep.subr.mxu0 0.0
        %650 = vmatpush2.msra.mxu0 0.0
        %651 = vmatprep.subr.mxu0 0.0
        %652 = vmatpush2.msra.mxu0 0.0
        %653 = vmatprep.subr.mxu0 0.0
        %654 = vmatpush2.msra.mxu0 0.0
        %655 = vmatprep.subr.mxu0 0.0
        %656 = vmatpush2.msra.mxu0 0.0
        %657 = vmatprep.subr.mxu0 0.0
        %658 = vmatpush2.msra.mxu0 0.0
        %659 = vmatprep.subr.mxu0 0.0
        %660 = vmatpush2.msra.mxu0 0.0
        %661 = vmatprep.subr.mxu0 0.0
        %662 = vmatpush2.msra.mxu0 0.0
        %663 = vmatprep.mubr.f32.mxu0 0.0
        %664 = vmatmul.mubr.f32.gmra.mxu0 %v595
        %v665 = vpop.f32.mrf.mxu0
        %v666 = vadd.f32 %v591, %v665
        %v667 = vpop.f32.mrf.mxu0
        %668 = vdwg.mxu0
        %v669 = vmax.f32 %v666, 0.0
        %v670 = vld [vmem:[%s6] sm:$0xff]
        %v671 = vld [vmem:[%s6 + $0x8] sm:$0xff]
        %v672 = vld [vmem:[%s6 + $0x10] sm:$0xff]
        %v673 = vld [vmem:[%s6 + $0x18] sm:$0xff]
        %v674 = vld [vmem:[%s6 + $0x20] sm:$0x1]
        %s675 = scalar_lea.vmem %s6, 40
        %v676 = vld [vmem:[%s675] sm:$0xff]
        %v677 = vld [vmem:[%s675 + $0x8] sm:$0xff]
        %v678 = vld [vmem:[%s675 + $0x10] sm:$0xff]
        %v679 = vld [vmem:[%s675 + $0x18] sm:$0xff]
        %v680 = vld [vmem:[%s675 + $0x20] sm:$0x1]
        %v682 = vrot.slane %v669, 4
        %vm683 = vcmask 269312
        %v684 = vsel %vm683, %v682, 0
        %vm686 = vcmask 1040384
        %v688 = vsel %vm686, %v680, 0
        %690 = vmatprep.subr.mxu0 0.0
        %691 = vmatpush1.msra.mxu0 0.0
        %692 = vmatprep.subr.mxu0 0.0
        %693 = vmatpush1.msra.mxu0 0.0
        %694 = vmatprep.subr.mxu0 0.0
        %695 = vmatpush1.msra.mxu0 0.0
        %696 = vmatprep.subr.mxu0 0.0
        %697 = vmatpush1.msra.mxu0 0.0
        %698 = vmatprep.subr.mxu0 0.0
        %699 = vmatpush1.msra.mxu0 0.0
        %700 = vmatprep.subr.mxu0 0.0
        %701 = vmatpush1.msra.mxu0 0.0
        %702 = vmatprep.subr.mxu0 0.0
        %703 = vmatpush1.msra.mxu0 0.0
        %704 = vmatprep.subr.mxu0 0.0
        %705 = vmatpush1.msra.mxu0 0.0
        %706 = vmatprep.subr.mxu0 0.0
        %707 = vmatpush1.msra.mxu0 0.0
        %708 = vmatprep.subr.mxu0 0.0
        %709 = vmatpush1.msra.mxu0 0.0
        %710 = vmatprep.subr.mxu0 0.0
        %711 = vmatpush1.msra.mxu0 0.0
        %712 = vmatprep.subr.mxu0 0.0
        %713 = vmatpush1.msra.mxu0 %v688
        %714 = vmatprep.subr.mxu0 0.0
        %715 = vmatpush1.msra.mxu0 %v679
        %716 = vmatprep.subr.mxu0 0.0
        %717 = vmatpush1.msra.mxu0 %v678
        %718 = vmatprep.subr.mxu0 0.0
        %719 = vmatpush1.msra.mxu0 %v677
        %720 = vmatprep.subr.mxu0 0.0
        %721 = vmatpush1.msra.mxu0 %v676
        %722 = vmatprep.subr.mxu0 0.0
        %723 = vmatpush2.msra.mxu0 0.0
        %724 = vmatprep.subr.mxu0 0.0
        %725 = vmatpush2.msra.mxu0 0.0
        %726 = vmatprep.subr.mxu0 0.0
        %727 = vmatpush2.msra.mxu0 0.0
        %728 = vmatprep.subr.mxu0 0.0
        %729 = vmatpush2.msra.mxu0 0.0
        %730 = vmatprep.subr.mxu0 0.0
        %731 = vmatpush2.msra.mxu0 0.0
        %732 = vmatprep.subr.mxu0 0.0
        %733 = vmatpush2.msra.mxu0 0.0
        %734 = vmatprep.subr.mxu0 0.0
        %735 = vmatpush2.msra.mxu0 0.0
        %736 = vmatprep.subr.mxu0 0.0
        %737 = vmatpush2.msra.mxu0 0.0
        %738 = vmatprep.subr.mxu0 0.0
        %739 = vmatpush2.msra.mxu0 0.0
        %740 = vmatprep.subr.mxu0 0.0
        %741 = vmatpush2.msra.mxu0 0.0
        %742 = vmatprep.subr.mxu0 0.0
        %743 = vmatpush2.msra.mxu0 0.0
        %744 = vmatprep.subr.mxu0 0.0
        %745 = vmatpush2.msra.mxu0 0.0
        %746 = vmatprep.subr.mxu0 0.0
        %747 = vmatpush2.msra.mxu0 0.0
        %748 = vmatprep.subr.mxu0 0.0
        %749 = vmatpush2.msra.mxu0 0.0
        %750 = vmatprep.subr.mxu0 0.0
        %751 = vmatpush2.msra.mxu0 0.0
        %752 = vmatprep.subr.mxu0 0.0
        %753 = vmatpush2.msra.mxu0 0.0
        %754 = vmatprep.mubr.f32.mxu0 0.0
        %755 = vmatmul.mubr.f32.gmra.mxu0 %v684
        %v756 = vpop.f32.mrf.mxu0
        %v757 = vadd.f32 0.0, %v756
        %v758 = vpop.f32.mrf.mxu0
        %759 = vdwg.mxu0
        %v760 = vsel %vm683, %v669, 0
        %v763 = vsel %vm686, %v674, 0
        %765 = vmatprep.subr.mxu0 0.0
        %766 = vmatpush1.msra.mxu0 0.0
        %767 = vmatprep.subr.mxu0 0.0
        %768 = vmatpush1.msra.mxu0 0.0
        %769 = vmatprep.subr.mxu0 0.0
        %770 = vmatpush1.msra.mxu0 0.0
        %771 = vmatprep.subr.mxu0 0.0
        %772 = vmatpush1.msra.mxu0 0.0
        %773 = vmatprep.subr.mxu0 0.0
        %774 = vmatpush1.msra.mxu0 0.0
        %775 = vmatprep.subr.mxu0 0.0
        %776 = vmatpush1.msra.mxu0 0.0
        %777 = vmatprep.subr.mxu0 0.0
        %778 = vmatpush1.msra.mxu0 0.0
        %779 = vmatprep.subr.mxu0 0.0
        %780 = vmatpush1.msra.mxu0 0.0
        %781 = vmatprep.subr.mxu0 0.0
        %782 = vmatpush1.msra.mxu0 0.0
        %783 = vmatprep.subr.mxu0 0.0
        %784 = vmatpush1.msra.mxu0 0.0
        %785 = vmatprep.subr.mxu0 0.0
        %786 = vmatpush1.msra.mxu0 0.0
        %787 = vmatprep.subr.mxu0 0.0
        %788 = vmatpush1.msra.mxu0 %v763
        %789 = vmatprep.subr.mxu0 0.0
        %790 = vmatpush1.msra.mxu0 %v673
        %791 = vmatprep.subr.mxu0 0.0
        %792 = vmatpush1.msra.mxu0 %v672
        %793 = vmatprep.subr.mxu0 0.0
        %794 = vmatpush1.msra.mxu0 %v671
        %795 = vmatprep.subr.mxu0 0.0
        %796 = vmatpush1.msra.mxu0 %v670
        %797 = vmatprep.subr.mxu0 0.0
        %798 = vmatpush2.msra.mxu0 0.0
        %799 = vmatprep.subr.mxu0 0.0
        %800 = vmatpush2.msra.mxu0 0.0
        %801 = vmatprep.subr.mxu0 0.0
        %802 = vmatpush2.msra.mxu0 0.0
        %803 = vmatprep.subr.mxu0 0.0
        %804 = vmatpush2.msra.mxu0 0.0
        %805 = vmatprep.subr.mxu0 0.0
        %806 = vmatpush2.msra.mxu0 0.0
        %807 = vmatprep.subr.mxu0 0.0
        %808 = vmatpush2.msra.mxu0 0.0
        %809 = vmatprep.subr.mxu0 0.0
        %810 = vmatpush2.msra.mxu0 0.0
        %811 = vmatprep.subr.mxu0 0.0
        %812 = vmatpush2.msra.mxu0 0.0
        %813 = vmatprep.subr.mxu0 0.0
        %814 = vmatpush2.msra.mxu0 0.0
        %815 = vmatprep.subr.mxu0 0.0
        %816 = vmatpush2.msra.mxu0 0.0
        %817 = vmatprep.subr.mxu0 0.0
        %818 = vmatpush2.msra.mxu0 0.0
        %819 = vmatprep.subr.mxu0 0.0
        %820 = vmatpush2.msra.mxu0 0.0
        %821 = vmatprep.subr.mxu0 0.0
        %822 = vmatpush2.msra.mxu0 0.0
        %823 = vmatprep.subr.mxu0 0.0
        %824 = vmatpush2.msra.mxu0 0.0
        %825 = vmatprep.subr.mxu0 0.0
        %826 = vmatpush2.msra.mxu0 0.0
        %827 = vmatprep.subr.mxu0 0.0
        %828 = vmatpush2.msra.mxu0 0.0
        %829 = vmatprep.mubr.f32.mxu0 0.0
        %830 = vmatmul.mubr.f32.gmra.mxu0 %v760
        %v831 = vpop.f32.mrf.mxu0
        %v832 = vadd.f32 %v757, %v831
        %v833 = vpop.f32.mrf.mxu0
        %834 = vdwg.mxu0
        %v835 = vld [vmem:[%s7] sm:$0xff]
        %v836 = vld [vmem:[%s7 + $0x8] sm:$0xff]
        %v837 = vrot.slane %v561, 4
        %838 = vrot.lane.b32.xlu0 %v837, 96
        %v839 = vpop.permute.xlu0 %838
        %v841 = vsel %vm584, %v832, %v839
        %v842 = vld [vmem:[%s8] sm:$0xff]
        %v843 = vld [vmem:[%s8 + $0x8] sm:$0xff]
        %845 = vset.pattern.permute.xlu0 0
        %846 = vperm.xlu0 %845, %v842
        %v847 = vpop.permute.xlu0 %846
        %850 = vset.pattern.permute.xlu0 0
        %851 = vperm.xlu0 %850, %v843
        %v852 = vpop.permute.xlu0 %851
        %vm854 = vcmask 64512
        %v856 = vsel %vm854, %v835, 0
        %v859 = vsel %vm854, %v836, 0
        %861 = vmatprep.subr.mxu0 0.0
        %862 = vmatpush1.msra.mxu0 0.0
        %863 = vmatprep.subr.mxu0 0.0
        %864 = vmatpush1.msra.mxu0 0.0
        %865 = vmatprep.subr.mxu0 0.0
        %866 = vmatpush1.msra.mxu0 0.0
        %867 = vmatprep.subr.mxu0 0.0
        %868 = vmatpush1.msra.mxu0 0.0
        %869 = vmatprep.subr.mxu0 0.0
        %870 = vmatpush1.msra.mxu0 0.0
        %871 = vmatprep.subr.mxu0 0.0
        %872 = vmatpush1.msra.mxu0 0.0
        %873 = vmatprep.subr.mxu0 0.0
        %874 = vmatpush1.msra.mxu0 0.0
        %875 = vmatprep.subr.mxu0 0.0
        %876 = vmatpush1.msra.mxu0 0.0
        %877 = vmatprep.subr.mxu0 0.0
        %878 = vmatpush1.msra.mxu0 0.0
        %879 = vmatprep.subr.mxu0 0.0
        %880 = vmatpush1.msra.mxu0 0.0
        %881 = vmatprep.subr.mxu0 0.0
        %882 = vmatpush1.msra.mxu0 0.0
        %883 = vmatprep.subr.mxu0 0.0
        %884 = vmatpush1.msra.mxu0 0.0
        %885 = vmatprep.subr.mxu0 0.0
        %886 = vmatpush1.msra.mxu0 0.0
        %887 = vmatprep.subr.mxu0 0.0
        %888 = vmatpush1.msra.mxu0 0.0
        %889 = vmatprep.subr.mxu0 0.0
        %890 = vmatpush1.msra.mxu0 0.0
        %891 = vmatprep.subr.mxu0 0.0
        %892 = vmatpush1.msra.mxu0 %v841
        %893 = vmatprep.subr.mxu0 0.0
        %894 = vmatpush2.msra.mxu0 0.0
        %895 = vmatprep.subr.mxu0 0.0
        %896 = vmatpush2.msra.mxu0 0.0
        %897 = vmatprep.subr.mxu0 0.0
        %898 = vmatpush2.msra.mxu0 0.0
        %899 = vmatprep.subr.mxu0 0.0
        %900 = vmatpush2.msra.mxu0 0.0
        %901 = vmatprep.subr.mxu0 0.0
        %902 = vmatpush2.msra.mxu0 0.0
        %903 = vmatprep.subr.mxu0 0.0
        %904 = vmatpush2.msra.mxu0 0.0
        %905 = vmatprep.subr.mxu0 0.0
        %906 = vmatpush2.msra.mxu0 0.0
        %907 = vmatprep.subr.mxu0 0.0
        %908 = vmatpush2.msra.mxu0 0.0
        %909 = vmatprep.subr.mxu0 0.0
        %910 = vmatpush2.msra.mxu0 0.0
        %911 = vmatprep.subr.mxu0 0.0
        %912 = vmatpush2.msra.mxu0 0.0
        %913 = vmatprep.subr.mxu0 0.0
        %914 = vmatpush2.msra.mxu0 0.0
        %915 = vmatprep.subr.mxu0 0.0
        %916 = vmatpush2.msra.mxu0 0.0
        %917 = vmatprep.subr.mxu0 0.0
        %918 = vmatpush2.msra.mxu0 0.0
        %919 = vmatprep.subr.mxu0 0.0
        %920 = vmatpush2.msra.mxu0 0.0
        %921 = vmatprep.subr.mxu0 0.0
        %922 = vmatpush2.msra.mxu0 0.0
        %923 = vmatprep.subr.mxu0 0.0
        %924 = vmatpush2.msra.mxu0 0.0
        %925 = vmatprep.mubr.f32.mxu0 0.0
        %926 = vmatmul.mubr.f32.gmra.mxu0 %v856
        %v927 = vpop.f32.mrf.mxu0
        %v928 = vadd.f32 %v847, %v927
        %v929 = vpop.f32.mrf.mxu0
        %930 = vmatprep.mubr.f32.mxu0 0.0
        %931 = vmatmul.mubr.f32.gmra.mxu0 %v859
        %v932 = vpop.f32.mrf.mxu0
        %v933 = vadd.f32 %v852, %v932
        %v934 = vpop.f32.mrf.mxu0
        %935 = vdwg.mxu0
        %vm936 = vcmask 261120
        %937 = vst.msk [vmem:[%s356] sm:$0xff] %vm936, %v928
        %938 = vst.msk [vmem:[%s356 + $0x8] sm:$0xff] %vm936, %v933
        %s939 = scalar_lea.vmem %s7, 16
        %v940 = vld [vmem:[%s939] sm:$0xff]
        %v941 = vld [vmem:[%s939 + $0x8] sm:$0xff]
        %s942 = scalar_lea.vmem %s8, 16
        %v943 = vld [vmem:[%s942] sm:$0xff]
        %v944 = vld [vmem:[%s942 + $0x8] sm:$0xff]
        %946 = vset.pattern.permute.xlu0 0
        %947 = vperm.xlu0 %946, %v943
        %v948 = vpop.permute.xlu0 %947
        %951 = vset.pattern.permute.xlu0 0
        %952 = vperm.xlu0 %951, %v944
        %v953 = vpop.permute.xlu0 %952
        %956 = vrot.lane.b32.xlu0 %v841, 96
        %v957 = vpop.permute.xlu0 %956
        %v960 = vsel %vm854, %v940, 0
        %v963 = vsel %vm854, %v941, 0
        %965 = vmatprep.subr.mxu0 0.0
        %966 = vmatpush1.msra.mxu0 0.0
        %967 = vmatprep.subr.mxu0 0.0
        %968 = vmatpush1.msra.mxu0 0.0
        %969 = vmatprep.subr.mxu0 0.0
        %970 = vmatpush1.msra.mxu0 0.0
        %971 = vmatprep.subr.mxu0 0.0
        %972 = vmatpush1.msra.mxu0 0.0
        %973 = vmatprep.subr.mxu0 0.0
        %974 = vmatpush1.msra.mxu0 0.0
        %975 = vmatprep.subr.mxu0 0.0
        %976 = vmatpush1.msra.mxu0 0.0
        %977 = vmatprep.subr.mxu0 0.0
        %978 = vmatpush1.msra.mxu0 0.0
        %979 = vmatprep.subr.mxu0 0.0
        %980 = vmatpush1.msra.mxu0 0.0
        %981 = vmatprep.subr.mxu0 0.0
        %982 = vmatpush1.msra.mxu0 0.0
        %983 = vmatprep.subr.mxu0 0.0
        %984 = vmatpush1.msra.mxu0 0.0
        %985 = vmatprep.subr.mxu0 0.0
        %986 = vmatpush1.msra.mxu0 0.0
        %987 = vmatprep.subr.mxu0 0.0
        %988 = vmatpush1.msra.mxu0 0.0
        %989 = vmatprep.subr.mxu0 0.0
        %990 = vmatpush1.msra.mxu0 0.0
        %991 = vmatprep.subr.mxu0 0.0
        %992 = vmatpush1.msra.mxu0 0.0
        %993 = vmatprep.subr.mxu0 0.0
        %994 = vmatpush1.msra.mxu0 0.0
        %995 = vmatprep.subr.mxu0 0.0
        %996 = vmatpush1.msra.mxu0 %v957
        %997 = vmatprep.subr.mxu0 0.0
        %998 = vmatpush2.msra.mxu0 0.0
        %999 = vmatprep.subr.mxu0 0.0
        %1000 = vmatpush2.msra.mxu0 0.0
        %1001 = vmatprep.subr.mxu0 0.0
        %1002 = vmatpush2.msra.mxu0 0.0
        %1003 = vmatprep.subr.mxu0 0.0
        %1004 = vmatpush2.msra.mxu0 0.0
        %1005 = vmatprep.subr.mxu0 0.0
        %1006 = vmatpush2.msra.mxu0 0.0
        %1007 = vmatprep.subr.mxu0 0.0
        %1008 = vmatpush2.msra.mxu0 0.0
        %1009 = vmatprep.subr.mxu0 0.0
        %1010 = vmatpush2.msra.mxu0 0.0
        %1011 = vmatprep.subr.mxu0 0.0
        %1012 = vmatpush2.msra.mxu0 0.0
        %1013 = vmatprep.subr.mxu0 0.0
        %1014 = vmatpush2.msra.mxu0 0.0
        %1015 = vmatprep.subr.mxu0 0.0
        %1016 = vmatpush2.msra.mxu0 0.0
        %1017 = vmatprep.subr.mxu0 0.0
        %1018 = vmatpush2.msra.mxu0 0.0
        %1019 = vmatprep.subr.mxu0 0.0
        %1020 = vmatpush2.msra.mxu0 0.0
        %1021 = vmatprep.subr.mxu0 0.0
        %1022 = vmatpush2.msra.mxu0 0.0
        %1023 = vmatprep.subr.mxu0 0.0
        %1024 = vmatpush2.msra.mxu0 0.0
        %1025 = vmatprep.subr.mxu0 0.0
        %1026 = vmatpush2.msra.mxu0 0.0
        %1027 = vmatprep.subr.mxu0 0.0
        %1028 = vmatpush2.msra.mxu0 0.0
        %1029 = vmatprep.mubr.f32.mxu0 0.0
        %1030 = vmatmul.mubr.f32.gmra.mxu0 %v960
        %v1031 = vpop.f32.mrf.mxu0
        %v1032 = vadd.f32 %v948, %v1031
        %v1033 = vpop.f32.mrf.mxu0
        %1034 = vmatprep.mubr.f32.mxu0 0.0
        %1035 = vmatmul.mubr.f32.gmra.mxu0 %v963
        %v1036 = vpop.f32.mrf.mxu0
        %v1037 = vadd.f32 %v953, %v1036
        %v1038 = vpop.f32.mrf.mxu0
        %1039 = vdwg.mxu0
        %1040 = vst.msk [vmem:[%s363] sm:$0xff] %vm936, %v1032
        %1041 = vst.msk [vmem:[%s363 + $0x8] sm:$0xff] %vm936, %v1037
        %s1042 = sand.u32 %s230, 1
        %s1043 = scalar_lea.sflag [#allocation3], %s1042
        %s1044 = sand.u32 %s230, 1
        %s1045 = smul.addr %s1044, 16
        %s1046 = scalar_lea.vmem [#allocation2], %s1045
        %s1047 = sand.u32 %s256, 1
        %s1048 = scalar_lea.sflag [#allocation5], %s1047
        %s1049 = sand.u32 %s256, 1
        %s1050 = smul.addr %s1049, 16
        %s1051 = scalar_lea.vmem [#allocation4], %s1050
        // Predicated region
        $region57: #{tpu_custom_call.1} parent=55 // pred_check
          %p1052 = pneg %p240
        $region58: #{tpu_custom_call.1} parent=55 // pred_check_branch
          %1054 = sbr.rel (%p1052) target = $region60
        $region59: #{tpu_custom_call.1} parent=55 // pred_region
          %s1056 = ssub.s32 256, 256
          %1057 = vsyncadd %s1043, %s1056
          %s1058 = smul.addr %s28, 2
          %s1059 = smul.addr %s1058, 128
          %s1060 = scalar_lea.hbm %s9, %s1059
          %s1061 = sshll.u32 %s1046, 4
          %s1062 = int_to_ptr.vmem [resolvable:$true] %s1061
          %1067 = dma.vmem_to_hbm [thread:$0]  %s1062, 256, %s1060, %s1043, 128, 128, 8
        $region60: #{tpu_custom_call.1} parent=55 // pred_fallthru
          _
        // Predicated region
        $region61: #{tpu_custom_call.1} parent=55 // pred_check
          %p1068 = pneg %p266
        $region62: #{tpu_custom_call.1} parent=55 // pred_check_branch
          %1070 = sbr.rel (%p1068) target = $region64
        $region63: #{tpu_custom_call.1} parent=55 // pred_region
          %s1072 = ssub.s32 256, 256
          %1073 = vsyncadd %s1048, %s1072
          %s1074 = smul.addr %s28, 2
          %s1075 = smul.addr %s1074, 128
          %s1076 = scalar_lea.hbm %s10, %s1075
          %s1077 = sshll.u32 %s1051, 4
          %s1078 = int_to_ptr.vmem [resolvable:$true] %s1077
          %1083 = dma.vmem_to_hbm [thread:$0]  %s1078, 256, %s1076, %s1048, 128, 128, 8
        $region64: #{tpu_custom_call.1} parent=55 // pred_fallthru
          _
      $region56: #{tpu_custom_call.1} parent=5 // pred_fallthru
        _
      %p1084 = scmp.le.s32.totalorder 2, %s23
      // Predicated region
      $region65: #{tpu_custom_call.1} parent=5 // pred_check
        %p1085 = pneg %p1084
      $region66: #{tpu_custom_call.1} parent=5 // pred_check_branch
        %1087 = sbr.rel (%p1085) target = $region68
      $region67: #{tpu_custom_call.1} parent=5 // pred_region
        %s1088 = ssub.s32 %s23, 2
        // Predicated region
        $region69: #{tpu_custom_call.1} parent=67 // pred_check
          %p1089 = pneg %p246
        $region70: #{tpu_custom_call.1} parent=67 // pred_check_branch
          %1091 = sbr.rel (%p1089) target = $region72
        $region71: #{tpu_custom_call.1} parent=67 // pred_region
          %s1092 = sand.u32 %s231, 1
          %s1093 = scalar_lea.sflag [#allocation3], %s1092
          %s1094 = sand.u32 %s231, 1
          %s1095 = smul.addr %s1094, 16
          %s1096 = scalar_lea.vmem [#allocation2], %s1095
          %1097 = dma.done %s1093, 256
        $region72: #{tpu_custom_call.1} parent=67 // pred_fallthru
          _
        // Predicated region
        $region73: #{tpu_custom_call.1} parent=67 // pred_check
          %p1098 = pneg %p272
        $region74: #{tpu_custom_call.1} parent=67 // pred_check_branch
          %1100 = sbr.rel (%p1098) target = $region76
        $region75: #{tpu_custom_call.1} parent=67 // pred_region
          %s1101 = sand.u32 %s257, 1
          %s1102 = scalar_lea.sflag [#allocation5], %s1101
          %s1103 = sand.u32 %s257, 1
          %s1104 = smul.addr %s1103, 16
          %s1105 = scalar_lea.vmem [#allocation4], %s1104
          %1106 = dma.done %s1102, 256
        $region76: #{tpu_custom_call.1} parent=67 // pred_fallthru
          _
      $region68: #{tpu_custom_call.1} parent=5 // pred_fallthru
        _
    $region6: #{tpu_custom_call.1} parent=1 // loop_footer
      %s27 = sadd.s32 1, %s23
    $region7: #{tpu_custom_call.1} parent=1 // loop_footer_branch
      %22 = sbr.rel target = $region3
    $region8: #{tpu_custom_call.1} parent=1 // loop_exit
      _
    %1107 = vsyncpa [#allocation3], 1
    %s1108 = scalar_lea.sflag [#allocation3], 1
    %1109 = vsyncpa %s1108, 1
    %1110 = vsyncpa [#allocation5], 1
    %s1111 = scalar_lea.sflag [#allocation5], 1
    %1112 = vsyncpa %s1111, 1

</llo_original>
